<compile_context>
chip_gen: v7x
topology: tpu7x:2x2x1
jax: 0.10.0
libtpu: 0.0.40
codegen_flags: <defaults>
</compile_context>

<pallas_src>
import jax
import jax.numpy as jnp
from jax import lax
from jax.experimental import pallas as pl
from jax.experimental.pallas import tpu as pltpu

# Module constants (fixed by the PyTorch source)
D_K = 1
D_MODEL = 64
D_Q = 1
D_V = 1
N_HEADS = 2112

# 2112 pads to 2304 = 2 tiles of 1152 (multiple of 128 -> lane-dense, unmasked stores).
HEAD_TILE = 1152


def mha_kernel(x_ref, w_ref, o_ref):
    # Per head-tile block:
    #   x_ref : (3, B, S, D)  bf16   (stacked x_q, x_k, x_v; constant block index)
    #   w_ref : (3, D, TH)    bf16   (stacked W_Q^T, W_K^T, W_V^T tile)
    #   o_ref : (B, S, TH)    bf16
    _, nb, ns, nd = x_ref.shape
    th = w_ref.shape[-1]

    # Projections on the MXU (bf16 x bf16 -> f32 accumulate), batch folded into M:
    #   [B*S, D] @ [D, TH] -> [B*S, TH]
    q = jnp.dot(x_ref[0].reshape(nb * ns, nd), w_ref[0],
                preferred_element_type=jnp.float32).reshape(nb, ns, th)
    k = jnp.dot(x_ref[1].reshape(nb * ns, nd), w_ref[1],
                preferred_element_type=jnp.float32).reshape(nb, ns, th)
    v = jnp.dot(x_ref[2].reshape(nb * ns, nd), w_ref[2],
                preferred_element_type=jnp.float32).reshape(nb, ns, th)

    # Fold both Frobenius normalizations (over the sequence axis) and K^T V into a
    # single per-(batch, head) [B, 1, TH] scale.  "/ sqrt(D_K)" omitted: D_K == 1.
    q_ss = jnp.sum(q * q, axis=1, keepdims=True)          # [B, 1, TH]
    k_ss = jnp.sum(k * k, axis=1, keepdims=True)          # [B, 1, TH]
    kv = jnp.sum(k * v, axis=1, keepdims=True)            # [B, 1, TH]
    # Clamp keeps the zero-padded head lanes at exactly 0 (no NaN); real heads with
    # non-degenerate inputs never hit it, matching the PyTorch math (no epsilon).
    scale = kv * lax.rsqrt(jnp.maximum(q_ss * k_ss, jnp.float32(1e-30)))  # EUP rsqrt

    # context = Q_norm @ (K_norm^T V): with d_q = d_k = d_v = 1 this is one per-head
    # broadcast multiply -- the only full-width elementwise pass.  bf16 store.
    o_ref[...] = (q * scale).astype(o_ref.dtype)


def multi_head_attention(xq, xk, xv, wq_t, wk_t, wv_t, *,
                         head_tile=HEAD_TILE, trim_heads=True):
    """xq/xk/xv: [B, S, D_MODEL].  w*_t: [D_MODEL, H] (W.T).

    Returns [B, S, H] bf16 (trim_heads=True) or the padded [B, S, H_pad] layout
    (trim_heads=False; padded lanes are exact zeros), avoiding the non-lane-aligned
    post-kernel slice for consumers that can handle padding.
    """
    assert head_tile % 128 == 0, "head tile must be lane-dense (multiple of 128)"
    B, S, D = xq.shape
    H = wq_t.shape[1]

    n_h = pl.cdiv(H, head_tile)
    h_pad = n_h * head_tile

    # Single stacked activation / weight streams (2 input DMA streams per step).
    # In a real model the stacked weight would be the canonical parameter layout.
    x_stk = jnp.stack([xq, xk, xv], axis=0)                       # [3, B, S, D]
    w_stk = jnp.stack([wq_t, wk_t, wv_t], axis=0)                 # [3, D, H]
    if h_pad != H:
        w_stk = jnp.pad(w_stk, ((0, 0), (0, 0), (0, h_pad - H)))  # [3, D, H_pad]

    # VMEM working set (double-buffered):
    #   x:   2 * 3*B*S*D*2      ~  12 KiB
    #   w:   2 * 3*D*TH*2       ~ 864 KiB
    #   out: 2 * B*S*TH*2       ~  72 KiB
    #   q/k/v f32 intermediates ~ 216 KiB
    # -> ~1.2 MiB; 8 MiB leaves ample headroom for compiler scratch on all chips.
    vmem_bytes = 8 * 1024 * 1024

    out = pl.pallas_call(
        mha_kernel,
        out_shape=jax.ShapeDtypeStruct((B, S, h_pad), jnp.bfloat16),
        grid_spec=pltpu.PrefetchScalarGridSpec(
            num_scalar_prefetch=0,
            # Single head-tile grid axis; batch lives inside the block.  Each
            # weight tile is DMA'd once, the activation block (constant index)
            # is DMA'd once total.
            grid=(n_h,),
            in_specs=[
                pl.BlockSpec((3, B, S, D), lambda h: (0, 0, 0, 0)),
                pl.BlockSpec((3, D, head_tile), lambda h: (0, 0, h)),
            ],
            out_specs=pl.BlockSpec((B, S, head_tile), lambda h: (0, 0, h)),
        ),
        compiler_params=pltpu.CompilerParams(
            # Head tiles are independent: on v7x the two TensorCores take one
            # tile each (grid=(2,)); on v5e/v6e this is a short serial loop.
            dimension_semantics=("parallel",),
            vmem_limit_bytes=vmem_bytes,
        ),
    )(x_stk, w_stk)

    return out[:, :, :H] if trim_heads else out


def reference(xq, xk, xv, wq_t, wk_t, wv_t):
    # Plain-JAX f32 reference mirroring the PyTorch math ([B,H,S,1] laid out as [B,S,H]).
    q = jnp.einsum("bsd,dh->bsh", xq, wq_t)
    k = jnp.einsum("bsd,dh->bsh", xk, wk_t)
    v = jnp.einsum("bsd,dh->bsh", xv, wv_t)
    qn = q / jnp.sqrt(jnp.sum(q * q, axis=1, keepdims=True))
    kn = k / jnp.sqrt(jnp.sum(k * k, axis=1, keepdims=True))
    ktv = jnp.sum(kn * v, axis=1, keepdims=True) / jnp.sqrt(jnp.float32(D_K))
    return qn * ktv                                   # [B, S, H]


if __name__ == "__main__":
    B, S = 2, 8
    key = jax.random.PRNGKey(0)
    k_xq, k_xk, k_xv, k_wq, k_wk, k_wv = jax.random.split(key, 6)

    xq = jax.random.normal(k_xq, (B, S, D_MODEL), dtype=jnp.float32)
    xk = jax.random.normal(k_xk, (B, S, D_MODEL), dtype=jnp.float32)
    xv = jax.random.normal(k_xv, (B, S, D_MODEL), dtype=jnp.float32)

    # nn.Linear(d_model, n_heads, bias=False) default init: U(-1/sqrt(d_model), 1/sqrt(d_model)).
    # Weights stored pre-transposed as [D_MODEL, N_HEADS].
    bound = 1.0 / (D_MODEL ** 0.5)
    wq_t = jax.random.uniform(k_wq, (D_MODEL, N_HEADS * D_Q), jnp.float32, -bound, bound)
    wk_t = jax.random.uniform(k_wk, (D_MODEL, N_HEADS * D_K), jnp.float32, -bound, bound)
    wv_t = jax.random.uniform(k_wv, (D_MODEL, N_HEADS * D_V), jnp.float32, -bound, bound)

    # bf16 operands into the kernel (halves the dominant weight HBM traffic; native
    # bf16 MXU with f32 accumulation).  The reference uses the same bf16-quantized
    # values upcast to f32, so the comparison isolates kernel correctness.
    xq_b, xk_b, xv_b = (t.astype(jnp.bfloat16) for t in (xq, xk, xv))
    wq_b, wk_b, wv_b = (t.astype(jnp.bfloat16) for t in (wq_t, wk_t, wv_t))

    out = multi_head_attention(xq_b, xk_b, xv_b, wq_b, wk_b, wv_b)
    out = jax.block_until_ready(out)

    ref = reference(*(t.astype(jnp.float32) for t in (xq_b, xk_b, xv_b, wq_b, wk_b, wv_b)))
    assert out.shape == (B, S, N_HEADS * D_V)
    assert not jnp.any(jnp.isnan(out))
    assert jnp.allclose(out.astype(jnp.float32), ref, rtol=1e-2, atol=1e-2)

    print("KERNEL_OK")
</pallas_src>

<mosaic_0001>
module attributes {stable_mosaic.version = 11 : i64} {
  func.func @mha_kernel(%arg0: i32, %arg1: memref<3x2x8x64xbf16, #tpu.memory_space<vmem>>, %arg2: memref<3x64x1152xbf16, #tpu.memory_space<vmem>>, %arg3: memref<2x8x1152xbf16, #tpu.memory_space<vmem>>) attributes {dimension_semantics = [#tpu.dimension_semantics<parallel>], iteration_bounds = array<i64: 2>, scalar_prefetch = 0 : i64, scratch_operands = 0 : i64, tpu.core_type = #tpu.core_type<tc>, window_params = [{pipeline_mode = #tpu.pipeline_mode<synchronous>, transform_indices = @transform_0, window_bounds = array<i64: 3, 2, 8, 64>}, {transform_indices = @transform_1, window_bounds = array<i64: 3, 64, 1152>}, {transform_indices = @transform_2, window_bounds = array<i64: 2, 8, 1152>}]} {
    %c0 = arith.constant 0 : index
    %c0_0 = arith.constant 0 : index
    %c0_1 = arith.constant 0 : index
    %c0_2 = arith.constant 0 : index
    %0 = vector.load %arg1[%c0, %c0_0, %c0_1, %c0_2] : memref<3x2x8x64xbf16, #tpu.memory_space<vmem>>, vector<1x2x8x64xbf16>
    %1 = vector.shape_cast %0 : vector<1x2x8x64xbf16> to vector<2x8x64xbf16>
    %2 = vector.shape_cast %1 : vector<2x8x64xbf16> to vector<16x64xbf16>
    %c0_3 = arith.constant 0 : index
    %c0_4 = arith.constant 0 : index
    %c0_5 = arith.constant 0 : index
    %3 = vector.load %arg2[%c0_3, %c0_4, %c0_5] : memref<3x64x1152xbf16, #tpu.memory_space<vmem>>, vector<1x64x1152xbf16>
    %4 = vector.shape_cast %3 : vector<1x64x1152xbf16> to vector<64x1152xbf16>
    %cst = arith.constant dense<0.000000e+00> : vector<16x1152xf32>
    %5 = tpu.matmul %2, %4, %cst {dimension_numbers = #tpu.dot_dimension_numbers<[1], [0], [0], [1], [0, 0, 1, 1], [], []>} : vector<16x64xbf16>, vector<64x1152xbf16>, vector<16x1152xf32> -> vector<16x1152xf32>
    %6 = vector.shape_cast %5 : vector<16x1152xf32> to vector<2x8x1152xf32>
    %c1 = arith.constant 1 : index
    %c0_6 = arith.constant 0 : index
    %c0_7 = arith.constant 0 : index
    %c0_8 = arith.constant 0 : index
    %7 = vector.load %arg1[%c1, %c0_6, %c0_7, %c0_8] : memref<3x2x8x64xbf16, #tpu.memory_space<vmem>>, vector<1x2x8x64xbf16>
    %8 = vector.shape_cast %7 : vector<1x2x8x64xbf16> to vector<2x8x64xbf16>
    %9 = vector.shape_cast %8 : vector<2x8x64xbf16> to vector<16x64xbf16>
    %c1_9 = arith.constant 1 : index
    %c0_10 = arith.constant 0 : index
    %c0_11 = arith.constant 0 : index
    %10 = vector.load %arg2[%c1_9, %c0_10, %c0_11] : memref<3x64x1152xbf16, #tpu.memory_space<vmem>>, vector<1x64x1152xbf16>
    %11 = vector.shape_cast %10 : vector<1x64x1152xbf16> to vector<64x1152xbf16>
    %cst_12 = arith.constant dense<0.000000e+00> : vector<16x1152xf32>
    %12 = tpu.matmul %9, %11, %cst_12 {dimension_numbers = #tpu.dot_dimension_numbers<[1], [0], [0], [1], [0, 0, 1, 1], [], []>} : vector<16x64xbf16>, vector<64x1152xbf16>, vector<16x1152xf32> -> vector<16x1152xf32>
    %13 = vector.shape_cast %12 : vector<16x1152xf32> to vector<2x8x1152xf32>
    %c2 = arith.constant 2 : index
    %c0_13 = arith.constant 0 : index
    %c0_14 = arith.constant 0 : index
    %c0_15 = arith.constant 0 : index
    %14 = vector.load %arg1[%c2, %c0_13, %c0_14, %c0_15] : memref<3x2x8x64xbf16, #tpu.memory_space<vmem>>, vector<1x2x8x64xbf16>
    %15 = vector.shape_cast %14 : vector<1x2x8x64xbf16> to vector<2x8x64xbf16>
    %16 = vector.shape_cast %15 : vector<2x8x64xbf16> to vector<16x64xbf16>
    %c2_16 = arith.constant 2 : index
    %c0_17 = arith.constant 0 : index
    %c0_18 = arith.constant 0 : index
    %17 = vector.load %arg2[%c2_16, %c0_17, %c0_18] : memref<3x64x1152xbf16, #tpu.memory_space<vmem>>, vector<1x64x1152xbf16>
    %18 = vector.shape_cast %17 : vector<1x64x1152xbf16> to vector<64x1152xbf16>
    %cst_19 = arith.constant dense<0.000000e+00> : vector<16x1152xf32>
    %19 = tpu.matmul %16, %18, %cst_19 {dimension_numbers = #tpu.dot_dimension_numbers<[1], [0], [0], [1], [0, 0, 1, 1], [], []>} : vector<16x64xbf16>, vector<64x1152xbf16>, vector<16x1152xf32> -> vector<16x1152xf32>
    %20 = vector.shape_cast %19 : vector<16x1152xf32> to vector<2x8x1152xf32>
    %21 = arith.mulf %6, %6 : vector<2x8x1152xf32>
    %cst_20 = arith.constant dense<0.000000e+00> : vector<2x1152xf32>
    %22 = vector.multi_reduction <add>, %21, %cst_20 [1] : vector<2x8x1152xf32> to vector<2x1152xf32>
    %23 = vector.shape_cast %22 : vector<2x1152xf32> to vector<2x1x1152xf32>
    %24 = arith.mulf %13, %13 : vector<2x8x1152xf32>
    %cst_21 = arith.constant dense<0.000000e+00> : vector<2x1152xf32>
    %25 = vector.multi_reduction <add>, %24, %cst_21 [1] : vector<2x8x1152xf32> to vector<2x1152xf32>
    %26 = vector.shape_cast %25 : vector<2x1152xf32> to vector<2x1x1152xf32>
    %27 = arith.mulf %13, %20 : vector<2x8x1152xf32>
    %cst_22 = arith.constant dense<0.000000e+00> : vector<2x1152xf32>
    %28 = vector.multi_reduction <add>, %27, %cst_22 [1] : vector<2x8x1152xf32> to vector<2x1152xf32>
    %29 = vector.shape_cast %28 : vector<2x1152xf32> to vector<2x1x1152xf32>
    %30 = arith.mulf %23, %26 : vector<2x1x1152xf32>
    %cst_23 = arith.constant 1.000000e-30 : f32
    %31 = vector.broadcast %cst_23 : f32 to vector<2x1x1152xf32>
    %32 = arith.maximumf %30, %31 : vector<2x1x1152xf32>
    %33 = math.rsqrt %32 : vector<2x1x1152xf32>
    %34 = arith.mulf %29, %33 : vector<2x1x1152xf32>
    %35 = vector.broadcast %34 : vector<2x1x1152xf32> to vector<2x8x1152xf32>
    %36 = arith.mulf %6, %35 : vector<2x8x1152xf32>
    %37 = arith.truncf %36 : vector<2x8x1152xf32> to vector<2x8x1152xbf16>
    %c0_24 = arith.constant 0 : index
    %c0_25 = arith.constant 0 : index
    %c0_26 = arith.constant 0 : index
    %38 = vector.load %arg3[%c0_24, %c0_25, %c0_26] : memref<2x8x1152xbf16, #tpu.memory_space<vmem>>, vector<2x8x1152xbf16>
    tpu.vector_store %arg3[%c0_24, %c0_25, %c0_26], %37 {strides = array<i32>} : memref<2x8x1152xbf16, #tpu.memory_space<vmem>>, vector<2x8x1152xbf16>,
    return
  }
  func.func @transform_0(%arg0: i32) -> (i32, i32, i32, i32) {
    %c0_i32 = arith.constant 0 : i32
    %c0_i32_0 = arith.constant 0 : i32
    %c0_i32_1 = arith.constant 0 : i32
    %c0_i32_2 = arith.constant 0 : i32
    %c0_i32_3 = arith.constant 0 : i32
    return %c0_i32, %c0_i32_0, %c0_i32_1, %c0_i32_2 : i32, i32, i32, i32
  }
  func.func @transform_1(%arg0: i32) -> (i32, i32, i32) {
    %c0_i32 = arith.constant 0 : i32
    %c0_i32_0 = arith.constant 0 : i32
    %c0_i32_1 = arith.constant 0 : i32
    return %c0_i32, %c0_i32_0, %arg0 : i32, i32, i32
  }
  func.func @transform_2(%arg0: i32) -> (i32, i32, i32) {
    %c0_i32 = arith.constant 0 : i32
    %c0_i32_0 = arith.constant 0 : i32
    %c0_i32_1 = arith.constant 0 : i32
    return %c0_i32, %c0_i32_0, %arg0 : i32, i32, i32
  }
}

</mosaic_0001>

<llo_original>
// kernel: tpu_custom_call.1
$region0: #{tpu_custom_call.1}
  #allocation0 [shape = 'u32[]', space=smem, size = 0x4, offset = 0x4, fixed_abs, tag = 'smem constant byte address 0x4 - core index']
  #allocation1 [shape = 'u32[144,128]{1,0:T(1,128)}', space=vmem, size = 0x12000, scoped, tag = 'internal scratch']
  %s0 = inlined_call_operand.hbm [shape: bf16[3,2,8,64], index: 0, kind: input, shape index: {}]
  %s1 = inlined_call_operand.hbm [shape: bf16[3,64,2304], index: 1, kind: input, shape index: {}]
  %s2 = inlined_call_operand.hbm [shape: bf16[2,8,2304], index: 2, kind: output, shape index: {}]
  %s3 = sld [smem:[#allocation0]]
  $region49: #{tpu_custom_call.1} parent=0
    _
  %s5 = ssub.s32 1, %s3
  %s6 = scalar_select 0, %s5, %s3
  $region1: #{tpu_custom_call.1} parent=0
    #allocation2 [shape = 'u8[12288]{0}', space=vmem, size = 0x3000, scoped, tag = 'input window, operand 0, single buffered']
    #allocation3 [shape = 's32[2]{0}', space=sflag, size = 0x8, scoped, tag = 'scoped memory for tpu_custom_call.1']
    #allocation4 [shape = 's32[2]{0}', space=sflag, size = 0x8, scoped, tag = 'scoped memory for tpu_custom_call.1']
    #allocation5 [shape = 'u8[884736]{0}', space=vmem, size = 0xd8000, scoped, tag = 'input window, operand 1']
    #allocation6 [shape = 's32[2]{0}', space=sflag, size = 0x8, scoped, tag = 'scoped memory for tpu_custom_call.1']
    #allocation7 [shape = 'u8[73728]{0}', space=vmem, size = 0x12000, scoped, tag = 'output window, operand 0']
    %7 = vsyncpa [#allocation3], 0
    %8 = vsyncpa [#allocation6], 0
    %s9 = scalar_lea.sflag [#allocation6], 1
    %10 = vsyncpa %s9, 0
    %11 = vsyncpa [#allocation4], 0
    %s12 = scalar_lea.sflag [#allocation4], 1
    %13 = vsyncpa %s12, 0
    loop: start=0, step=1, limit=4
    $region2: #{tpu_custom_call.1} parent=1 // loop_pre_header
      _
    $region3: #{tpu_custom_call.1} parent=1 // loop_header
      %s15 = sphi 0, %s19
      %p16 = scmp.ge.s32.totalorder %s15, 4
      %s23 = sphi 0, %s23
      %s25 = sphi 0, %s23
      %s26 = sphi 0, %s25
      %s40 = sphi 0, %s26
      %s46 = sphi 0, %s48
      %s49 = sphi 0, %s46
      %s50 = sphi 0, %s49
      %s66 = sphi 0, %s50
      %s72 = sphi 0, %s74
      %s75 = sphi 0, %s72
      %s76 = sphi 0, %s75
      %s92 = sphi 0, %s76
    $region4: #{tpu_custom_call.1} parent=1 // loop_header_branch
      %18 = sbr.rel (%p16) target = $region8
    $region5: #{tpu_custom_call.1} parent=1 // loop_body
      %s20 = ssub.s32 %s15, 1
      %s21 = ssub.s32 %s15, 2
      %s22 = sadd.s32 %s15, 1
      %s24 = sadd.s32 %s23, 1
      %p27 = scmp.eq.s32.totalorder %s15, 1
      %p28 = scmp.ne.s32.totalorder %s23, %s25
      %p29 = scmp.eq.s32.totalorder %s15, 0
      %p30 = por %p28, %p29
      %p31 = scmp.ne.s32.totalorder %s23, %s25
      %p32 = scmp.eq.s32.totalorder %s20, 1
      %p33 = por %p31, %p32
      %p34 = scmp.ne.s32.totalorder %s25, %s26
      %p35 = scmp.eq.s32.totalorder %s20, 0
      %p36 = por %p34, %p35
      %p37 = scmp.ne.s32.totalorder %s25, %s26
      %p38 = scmp.eq.s32.totalorder %s21, 1
      %p39 = por %p37, %p38
      %p41 = scmp.ne.s32.totalorder %s26, %s40
      %p42 = scmp.eq.s32.totalorder %s21, 0
      %p43 = por %p41, %p42
      %s44 = ssub.s32 %s15, %s22
      %p45 = scmp.eq.s32.totalorder %s44, 0
      %s47 = sadd.s32 %s46, 1
      %s48 = scalar_select %p45, %s46, %s47
      %p51 = pneg %p45
      %p52 = scmp.eq.s32.totalorder %s15, 1
      %p53 = por %p51, %p52
      %p54 = scmp.ne.s32.totalorder %s46, %s49
      %p55 = scmp.eq.s32.totalorder %s15, 0
      %p56 = por %p54, %p55
      %p57 = scmp.ne.s32.totalorder %s46, %s49
      %p58 = scmp.eq.s32.totalorder %s20, 1
      %p59 = por %p57, %p58
      %p60 = scmp.ne.s32.totalorder %s49, %s50
      %p61 = scmp.eq.s32.totalorder %s20, 0
      %p62 = por %p60, %p61
      %p63 = scmp.ne.s32.totalorder %s49, %s50
      %p64 = scmp.eq.s32.totalorder %s21, 1
      %p65 = por %p63, %p64
      %p67 = scmp.ne.s32.totalorder %s50, %s66
      %p68 = scmp.eq.s32.totalorder %s21, 0
      %p69 = por %p67, %p68
      %s70 = ssub.s32 %s15, %s22
      %p71 = scmp.eq.s32.totalorder %s70, 0
      %s73 = sadd.s32 %s72, 1
      %s74 = scalar_select %p71, %s72, %s73
      %p77 = pneg %p71
      %p78 = scmp.eq.s32.totalorder %s15, 1
      %p79 = por %p77, %p78
      %p80 = scmp.ne.s32.totalorder %s72, %s75
      %p81 = scmp.eq.s32.totalorder %s15, 0
      %p82 = por %p80, %p81
      %p83 = scmp.ne.s32.totalorder %s72, %s75
      %p84 = scmp.eq.s32.totalorder %s20, 1
      %p85 = por %p83, %p84
      %p86 = scmp.ne.s32.totalorder %s75, %s76
      %p87 = scmp.eq.s32.totalorder %s20, 0
      %p88 = por %p86, %p87
      %p89 = scmp.ne.s32.totalorder %s75, %s76
      %p90 = scmp.eq.s32.totalorder %s21, 1
      %p91 = por %p89, %p90
      %p93 = scmp.ne.s32.totalorder %s76, %s92
      %p94 = scmp.eq.s32.totalorder %s21, 0
      %p95 = por %p93, %p94
      %p96 = scmp.le.s32.totalorder 1, %s15
      %p97 = scmp.lt.s32.totalorder %s15, 3
      %p98 = pnand %p96, %p97
      %p99 = pneg %p98
      // Predicated region
      $region9: #{tpu_custom_call.1} parent=5 // pred_check
        _
      $region10: #{tpu_custom_call.1} parent=5 // pred_check_branch
        %101 = sbr.rel (%p98) target = $region12
      $region11: #{tpu_custom_call.1} parent=5 // pred_region
        %s102 = ssub.s32 %s15, 1
        // Predicated region
        $region13: #{tpu_custom_call.1} parent=11 // pred_check
          %p103 = pneg %p36
        $region14: #{tpu_custom_call.1} parent=11 // pred_check_branch
          %105 = sbr.rel (%p103) target = $region16
        $region15: #{tpu_custom_call.1} parent=11 // pred_region
          %s107 = ssub.s32 384, 384
          %108 = vsyncadd [#allocation3], %s107
          %s109 = sshll.u32 [#allocation2], 4
          %s110 = int_to_ptr.vmem [resolvable:$true] %s109
          %115 = dma.hbm_to_vmem [thread:$0]  %s0, 384, %s110, [#allocation3], 64, 64, 4
        $region16: #{tpu_custom_call.1} parent=11 // pred_fallthru
          _
      $region12: #{tpu_custom_call.1} parent=5 // pred_fallthru
        _
      %p116 = scmp.lt.s32.totalorder %s15, 2
      // Predicated region
      $region17: #{tpu_custom_call.1} parent=5 // pred_check
        %p117 = pneg %p116
      $region18: #{tpu_custom_call.1} parent=5 // pred_check_branch
        %119 = sbr.rel (%p117) target = $region20
      $region19: #{tpu_custom_call.1} parent=5 // pred_region
        // Predicated region
        $region21: #{tpu_custom_call.1} parent=19 // pred_check
          %p120 = pneg %p56
        $region22: #{tpu_custom_call.1} parent=19 // pred_check_branch
          %122 = sbr.rel (%p120) target = $region24
        $region23: #{tpu_custom_call.1} parent=19 // pred_region
          %s123 = sand.u32 %s46, 1
          %s124 = scalar_lea.sflag [#allocation6], %s123
          %s125 = sand.u32 %s46, 1
          %s126 = smul.addr %s125, 864
          %s127 = scalar_lea.vmem [#allocation5], %s126
          %s128 = smul.u32 9, %s15
          %s130 = ssub.s32 13824, 13824
          %131 = vsyncadd %s124, %s130
          %s132 = smul.addr %s128, 64
          %s133 = scalar_lea.hbm %s1, %s132
          %s134 = sshll.u32 %s127, 4
          %s135 = int_to_ptr.vmem [resolvable:$true] %s134
          %140 = dma.hbm_to_vmem [thread:$0]  %s133, 13824, %s135, %s124, 1152, 576, 36
        $region24: #{tpu_custom_call.1} parent=19 // pred_fallthru
          _
      $region20: #{tpu_custom_call.1} parent=5 // pred_fallthru
        _
      %p141 = scmp.le.s32.totalorder 1, %s15
      %p142 = scmp.lt.s32.totalorder %s15, 3
      %p143 = pnand %p141, %p142
      %p144 = pneg %p143
      // Predicated region
      $region25: #{tpu_custom_call.1} parent=5 // pred_check
        _
      $region26: #{tpu_custom_call.1} parent=5 // pred_check_branch
        %146 = sbr.rel (%p143) target = $region28
      $region27: #{tpu_custom_call.1} parent=5 // pred_region
        %s147 = ssub.s32 %s15, 1
        // Predicated region
        $region29: #{tpu_custom_call.1} parent=27 // pred_check
          %p148 = pneg %p36
        $region30: #{tpu_custom_call.1} parent=27 // pred_check_branch
          %150 = sbr.rel (%p148) target = $region32
        $region31: #{tpu_custom_call.1} parent=27 // pred_region
          %151 = dma.done [#allocation3], 384
        $region32: #{tpu_custom_call.1} parent=27 // pred_fallthru
          _
        %s152 = sand.u32 %s49, 1
        %s153 = scalar_lea.sflag [#allocation6], %s152
        %s154 = sand.u32 %s49, 1
        %s155 = smul.addr %s154, 864
        %s156 = scalar_lea.vmem [#allocation5], %s155
        // Predicated region
        $region33: #{tpu_custom_call.1} parent=27 // pred_check
          %p157 = pneg %p62
        $region34: #{tpu_custom_call.1} parent=27 // pred_check_branch
          %159 = sbr.rel (%p157) target = $region36
        $region35: #{tpu_custom_call.1} parent=27 // pred_region
          %160 = dma.done %s153, 13824
        $region36: #{tpu_custom_call.1} parent=27 // pred_fallthru
          _
        %p161 = pneg %p36
        %p162 = pneg %p33
        %s163 = sand.u32 %s49, 1
        %s164 = scalar_lea.sflag [#allocation6], %s163
        %s165 = sand.u32 %s49, 1
        %s166 = smul.addr %s165, 864
        %s167 = scalar_lea.vmem [#allocation5], %s166
        %p168 = pneg %p62
        %p169 = pneg %p59
        %p170 = pneg %p88
        %p171 = pneg %p85
        %s172 = sand.u32 %s75, 1
        %s173 = scalar_lea.sflag [#allocation4], %s172
        %s174 = sand.u32 %s75, 1
        %s175 = smul.addr %s174, 72
        %s176 = scalar_lea.vmem [#allocation7], %s175
        %s177 = smul.u32 9, %s20
        %s178 = smul.u32 9, %s20
        %v180 = vld [vmem:[#allocation2] sm:$0xf]
        %v181 = vld [vmem:[#allocation2 + $0x4] sm:$0xf]
        %v182 = vld [vmem:[%s156] sm:$0xff]
        %v183 = vld [vmem:[%s156 + $0x8] sm:$0xff]
        %v184 = vld [vmem:[%s156 + $0x10] sm:$0xff]
        %v185 = vld [vmem:[%s156 + $0x18] sm:$0xff]
        %v186 = vld [vmem:[%s156 + $0x20] sm:$0xf]
        %v187 = vld [vmem:[%s156 + $0x24] sm:$0xff]
        %v188 = vld [vmem:[%s156 + $0x2c] sm:$0xff]
        %v189 = vld [vmem:[%s156 + $0x34] sm:$0xff]
        %v190 = vld [vmem:[%s156 + $0x3c] sm:$0xff]
        %v191 = vld [vmem:[%s156 + $0x44] sm:$0xf]
        %v192 = vld [vmem:[%s156 + $0x48] sm:$0xff]
        %v193 = vld [vmem:[%s156 + $0x50] sm:$0xff]
        %v194 = vld [vmem:[%s156 + $0x58] sm:$0xff]
        %v195 = vld [vmem:[%s156 + $0x60] sm:$0xff]
        %v196 = vld [vmem:[%s156 + $0x68] sm:$0xf]
        %v197 = vld [vmem:[%s156 + $0x6c] sm:$0xff]
        %v198 = vld [vmem:[%s156 + $0x74] sm:$0xff]
        %v199 = vld [vmem:[%s156 + $0x7c] sm:$0xff]
        %v200 = vld [vmem:[%s156 + $0x84] sm:$0xff]
        %v201 = vld [vmem:[%s156 + $0x8c] sm:$0xf]
        %v202 = vld [vmem:[%s156 + $0x90] sm:$0xff]
        %v203 = vld [vmem:[%s156 + $0x98] sm:$0xff]
        %v204 = vld [vmem:[%s156 + $0xa0] sm:$0xff]
        %v205 = vld [vmem:[%s156 + $0xa8] sm:$0xff]
        %v206 = vld [vmem:[%s156 + $0xb0] sm:$0xf]
        %v207 = vld [vmem:[%s156 + $0xb4] sm:$0xff]
        %v208 = vld [vmem:[%s156 + $0xbc] sm:$0xff]
        %v209 = vld [vmem:[%s156 + $0xc4] sm:$0xff]
        %v210 = vld [vmem:[%s156 + $0xcc] sm:$0xff]
        %v211 = vld [vmem:[%s156 + $0xd4] sm:$0xf]
        %v212 = vld [vmem:[%s156 + $0xd8] sm:$0xff]
        %v213 = vld [vmem:[%s156 + $0xe0] sm:$0xff]
        %v214 = vld [vmem:[%s156 + $0xe8] sm:$0xff]
        %v215 = vld [vmem:[%s156 + $0xf0] sm:$0xff]
        %v216 = vld [vmem:[%s156 + $0xf8] sm:$0xf]
        %v217 = vld [vmem:[%s156 + $0xfc] sm:$0xff]
        %v218 = vld [vmem:[%s156 + $0x104] sm:$0xff]
        %v219 = vld [vmem:[%s156 + $0x10c] sm:$0xff]
        %v220 = vld [vmem:[%s156 + $0x114] sm:$0xff]
        %v221 = vld [vmem:[%s156 + $0x11c] sm:$0xf]
        %v224 = vunpack.c.l.b16 %v180
        %v225 = vunpack.c.l.b16 %v181
        %v226 = vpack.c.b16 %v225, %v224
        %v267 = vunpack.c.l.b16 %v182
        %v268 = vunpack.c.h.b16 %v182
        %v269 = vunpack.c.l.b16 %v183
        %v270 = vunpack.c.h.b16 %v183
        %v271 = vunpack.c.l.b16 %v184
        %v272 = vunpack.c.h.b16 %v184
        %v273 = vunpack.c.l.b16 %v185
        %v274 = vunpack.c.h.b16 %v185
        %v275 = vunpack.c.l.b16 %v186
        %v276 = vunpack.c.l.b16 %v187
        %v277 = vunpack.c.h.b16 %v187
        %v278 = vunpack.c.l.b16 %v188
        %v279 = vunpack.c.h.b16 %v188
        %v280 = vunpack.c.l.b16 %v189
        %v281 = vunpack.c.h.b16 %v189
        %v282 = vunpack.c.l.b16 %v190
        %v283 = vunpack.c.h.b16 %v190
        %v284 = vunpack.c.l.b16 %v191
        %v285 = vunpack.c.l.b16 %v192
        %v286 = vunpack.c.h.b16 %v192
        %v287 = vunpack.c.l.b16 %v193
        %v288 = vunpack.c.h.b16 %v193
        %v289 = vunpack.c.l.b16 %v194
        %v290 = vunpack.c.h.b16 %v194
        %v291 = vunpack.c.l.b16 %v195
        %v292 = vunpack.c.h.b16 %v195
        %v293 = vunpack.c.l.b16 %v196
        %v294 = vunpack.c.l.b16 %v197
        %v295 = vunpack.c.h.b16 %v197
        %v296 = vunpack.c.l.b16 %v198
        %v297 = vunpack.c.h.b16 %v198
        %v298 = vunpack.c.l.b16 %v199
        %v299 = vunpack.c.h.b16 %v199
        %v300 = vunpack.c.l.b16 %v200
        %v301 = vunpack.c.h.b16 %v200
        %v302 = vunpack.c.l.b16 %v201
        %v303 = vunpack.c.l.b16 %v202
        %v304 = vunpack.c.h.b16 %v202
        %v305 = vunpack.c.l.b16 %v203
        %v306 = vunpack.c.h.b16 %v203
        %v307 = vunpack.c.l.b16 %v204
        %v308 = vunpack.c.h.b16 %v204
        %v309 = vunpack.c.l.b16 %v205
        %v310 = vunpack.c.h.b16 %v205
        %v311 = vunpack.c.l.b16 %v206
        %v312 = vunpack.c.l.b16 %v207
        %v313 = vunpack.c.h.b16 %v207
        %v314 = vunpack.c.l.b16 %v208
        %v315 = vunpack.c.h.b16 %v208
        %v316 = vunpack.c.l.b16 %v209
        %v317 = vunpack.c.h.b16 %v209
        %v318 = vunpack.c.l.b16 %v210
        %v319 = vunpack.c.h.b16 %v210
        %v320 = vunpack.c.l.b16 %v211
        %v321 = vunpack.c.l.b16 %v212
        %v322 = vunpack.c.h.b16 %v212
        %v323 = vunpack.c.l.b16 %v213
        %v324 = vunpack.c.h.b16 %v213
        %v325 = vunpack.c.l.b16 %v214
        %v326 = vunpack.c.h.b16 %v214
        %v327 = vunpack.c.l.b16 %v215
        %v328 = vunpack.c.h.b16 %v215
        %v329 = vunpack.c.l.b16 %v216
        %v330 = vunpack.c.l.b16 %v217
        %v331 = vunpack.c.h.b16 %v217
        %v332 = vunpack.c.l.b16 %v218
        %v333 = vunpack.c.h.b16 %v218
        %v334 = vunpack.c.l.b16 %v219
        %v335 = vunpack.c.h.b16 %v219
        %v336 = vunpack.c.l.b16 %v220
        %v337 = vunpack.c.h.b16 %v220
        %v338 = vunpack.c.l.b16 %v221
        %v339 = vpack.c.b16 %v276, %v267
        %v340 = vpack.c.b16 %v277, %v268
        %v341 = vpack.c.b16 %v278, %v269
        %v342 = vpack.c.b16 %v279, %v270
        %v343 = vpack.c.b16 %v280, %v271
        %v344 = vpack.c.b16 %v281, %v272
        %v345 = vpack.c.b16 %v282, %v273
        %v346 = vpack.c.b16 %v283, %v274
        %v347 = vpack.c.b16 %v284, %v275
        %v348 = vpack.c.b16 %v294, %v285
        %v349 = vpack.c.b16 %v295, %v286
        %v350 = vpack.c.b16 %v296, %v287
        %v351 = vpack.c.b16 %v297, %v288
        %v352 = vpack.c.b16 %v298, %v289
        %v353 = vpack.c.b16 %v299, %v290
        %v354 = vpack.c.b16 %v300, %v291
        %v355 = vpack.c.b16 %v301, %v292
        %v356 = vpack.c.b16 %v302, %v293
        %v357 = vpack.c.b16 %v312, %v303
        %v358 = vpack.c.b16 %v313, %v304
        %v359 = vpack.c.b16 %v314, %v305
        %v360 = vpack.c.b16 %v315, %v306
        %v361 = vpack.c.b16 %v316, %v307
        %v362 = vpack.c.b16 %v317, %v308
        %v363 = vpack.c.b16 %v318, %v309
        %v364 = vpack.c.b16 %v319, %v310
        %v365 = vpack.c.b16 %v320, %v311
        %v366 = vpack.c.b16 %v330, %v321
        %v367 = vpack.c.b16 %v331, %v322
        %v368 = vpack.c.b16 %v332, %v323
        %v369 = vpack.c.b16 %v333, %v324
        %v370 = vpack.c.b16 %v334, %v325
        %v371 = vpack.c.b16 %v335, %v326
        %v372 = vpack.c.b16 %v336, %v327
        %v373 = vpack.c.b16 %v337, %v328
        %v374 = vpack.c.b16 %v338, %v329
        %vm411 = vcmask 523264
        %v413 = vsel %vm411, %v226, 0
        %415 = vmatprep.subr.bf16.mxu0 %v340
        %416 = vmatpush1.bf16.msra.mxu0 %v339
        %417 = vmatprep.subr.bf16.mxu0 %v349
        %418 = vmatpush1.bf16.msra.mxu0 %v348
        %419 = vmatprep.subr.bf16.mxu0 %v358
        %420 = vmatpush1.bf16.msra.mxu0 %v357
        %421 = vmatprep.subr.bf16.mxu0 %v367
        %422 = vmatpush1.bf16.msra.mxu0 %v366
        %423 = vmatprep.subr.bf16.mxu0 0
        %424 = vmatpush1.bf16.msra.mxu0 0
        %425 = vmatprep.subr.bf16.mxu0 0
        %426 = vmatpush1.bf16.msra.mxu0 0
        %427 = vmatprep.subr.bf16.mxu0 0
        %428 = vmatpush1.bf16.msra.mxu0 0
        %429 = vmatprep.subr.bf16.mxu0 0
        %430 = vmatpush1.bf16.msra.mxu0 0
        %431 = vmatprep.subr.bf16.mxu0 0
        %432 = vmatpush1.bf16.msra.mxu0 0
        %433 = vmatprep.subr.bf16.mxu0 0
        %434 = vmatpush1.bf16.msra.mxu0 0
        %435 = vmatprep.subr.bf16.mxu0 0
        %436 = vmatpush1.bf16.msra.mxu0 0
        %437 = vmatprep.subr.bf16.mxu0 0
        %438 = vmatpush1.bf16.msra.mxu0 0
        %439 = vmatprep.subr.bf16.mxu0 0
        %440 = vmatpush1.bf16.msra.mxu0 0
        %441 = vmatprep.subr.bf16.mxu0 0
        %442 = vmatpush1.bf16.msra.mxu0 0
        %443 = vmatprep.subr.bf16.mxu0 0
        %444 = vmatpush1.bf16.msra.mxu0 0
        %445 = vmatprep.subr.bf16.mxu0 0
        %446 = vmatpush1.bf16.msra.mxu0 0
        %447 = vmatprep.mubr.bf16.mxu0 0
        %448 = vmatmul.mubr.bf16.gmra.mrb[0].mxu0 %v413
        %v449 = vpop.f32.mrb[0].mxu0
        %v450 = vadd.f32 0.0, %v449
        %v451 = vpop.f32.mrb[0].mxu0
        %v452 = vadd.f32 0.0, %v451
        %v453 = vpop.f32.mrb[0].mxu0
        %v454 = vadd.f32 0.0, %v453
        %v455 = vpop.f32.mrb[0].mxu0
        %v456 = vadd.f32 0.0, %v455
        %457 = vdwg.mxu0
        %458 = vmatprep.subr.bf16.mxu0 %v342
        %459 = vmatpush1.bf16.msra.mxu0 %v341
        %460 = vmatprep.subr.bf16.mxu0 %v351
        %461 = vmatpush1.bf16.msra.mxu0 %v350
        %462 = vmatprep.subr.bf16.mxu0 %v360
        %463 = vmatpush1.bf16.msra.mxu0 %v359
        %464 = vmatprep.subr.bf16.mxu0 %v369
        %465 = vmatpush1.bf16.msra.mxu0 %v368
        %466 = vmatprep.subr.bf16.mxu0 0
        %467 = vmatpush1.bf16.msra.mxu0 0
        %468 = vmatprep.subr.bf16.mxu0 0
        %469 = vmatpush1.bf16.msra.mxu0 0
        %470 = vmatprep.subr.bf16.mxu0 0
        %471 = vmatpush1.bf16.msra.mxu0 0
        %472 = vmatprep.subr.bf16.mxu0 0
        %473 = vmatpush1.bf16.msra.mxu0 0
        %474 = vmatprep.subr.bf16.mxu0 0
        %475 = vmatpush1.bf16.msra.mxu0 0
        %476 = vmatprep.subr.bf16.mxu0 0
        %477 = vmatpush1.bf16.msra.mxu0 0
        %478 = vmatprep.subr.bf16.mxu0 0
        %479 = vmatpush1.bf16.msra.mxu0 0
        %480 = vmatprep.subr.bf16.mxu0 0
        %481 = vmatpush1.bf16.msra.mxu0 0
        %482 = vmatprep.subr.bf16.mxu0 0
        %483 = vmatpush1.bf16.msra.mxu0 0
        %484 = vmatprep.subr.bf16.mxu0 0
        %485 = vmatpush1.bf16.msra.mxu0 0
        %486 = vmatprep.subr.bf16.mxu0 0
        %487 = vmatpush1.bf16.msra.mxu0 0
        %488 = vmatprep.subr.bf16.mxu0 0
        %489 = vmatpush1.bf16.msra.mxu0 0
        %490 = vmatprep.mubr.bf16.mxu0 0
        %491 = vmatmul.mubr.bf16.gmra.mrb[0].mxu0 %v413
        %v492 = vpop.f32.mrb[0].mxu0
        %v493 = vadd.f32 0.0, %v492
        %v494 = vpop.f32.mrb[0].mxu0
        %v495 = vadd.f32 0.0, %v494
        %v496 = vpop.f32.mrb[0].mxu0
        %v497 = vadd.f32 0.0, %v496
        %v498 = vpop.f32.mrb[0].mxu0
        %v499 = vadd.f32 0.0, %v498
        %500 = vdwg.mxu0
        %501 = vmatprep.subr.bf16.mxu0 %v344
        %502 = vmatpush1.bf16.msra.mxu0 %v343
        %503 = vmatprep.subr.bf16.mxu0 %v353
        %504 = vmatpush1.bf16.msra.mxu0 %v352
        %505 = vmatprep.subr.bf16.mxu0 %v362
        %506 = vmatpush1.bf16.msra.mxu0 %v361
        %507 = vmatprep.subr.bf16.mxu0 %v371
        %508 = vmatpush1.bf16.msra.mxu0 %v370
        %509 = vmatprep.subr.bf16.mxu0 0
        %510 = vmatpush1.bf16.msra.mxu0 0
        %511 = vmatprep.subr.bf16.mxu0 0
        %512 = vmatpush1.bf16.msra.mxu0 0
        %513 = vmatprep.subr.bf16.mxu0 0
        %514 = vmatpush1.bf16.msra.mxu0 0
        %515 = vmatprep.subr.bf16.mxu0 0
        %516 = vmatpush1.bf16.msra.mxu0 0
        %517 = vmatprep.subr.bf16.mxu0 0
        %518 = vmatpush1.bf16.msra.mxu0 0
        %519 = vmatprep.subr.bf16.mxu0 0
        %520 = vmatpush1.bf16.msra.mxu0 0
        %521 = vmatprep.subr.bf16.mxu0 0
        %522 = vmatpush1.bf16.msra.mxu0 0
        %523 = vmatprep.subr.bf16.mxu0 0
        %524 = vmatpush1.bf16.msra.mxu0 0
        %525 = vmatprep.subr.bf16.mxu0 0
        %526 = vmatpush1.bf16.msra.mxu0 0
        %527 = vmatprep.subr.bf16.mxu0 0
        %528 = vmatpush1.bf16.msra.mxu0 0
        %529 = vmatprep.subr.bf16.mxu0 0
        %530 = vmatpush1.bf16.msra.mxu0 0
        %531 = vmatprep.subr.bf16.mxu0 0
        %532 = vmatpush1.bf16.msra.mxu0 0
        %533 = vmatprep.mubr.bf16.mxu0 0
        %534 = vmatmul.mubr.bf16.gmra.mrb[0].mxu0 %v413
        %v535 = vpop.f32.mrb[0].mxu0
        %v536 = vadd.f32 0.0, %v535
        %v537 = vpop.f32.mrb[0].mxu0
        %v538 = vadd.f32 0.0, %v537
        %v539 = vpop.f32.mrb[0].mxu0
        %v540 = vadd.f32 0.0, %v539
        %v541 = vpop.f32.mrb[0].mxu0
        %v542 = vadd.f32 0.0, %v541
        %543 = vdwg.mxu0
        %544 = vmatprep.subr.bf16.mxu0 %v346
        %545 = vmatpush1.bf16.msra.mxu0 %v345
        %546 = vmatprep.subr.bf16.mxu0 %v355
        %547 = vmatpush1.bf16.msra.mxu0 %v354
        %548 = vmatprep.subr.bf16.mxu0 %v364
        %549 = vmatpush1.bf16.msra.mxu0 %v363
        %550 = vmatprep.subr.bf16.mxu0 %v373
        %551 = vmatpush1.bf16.msra.mxu0 %v372
        %552 = vmatprep.subr.bf16.mxu0 0
        %553 = vmatpush1.bf16.msra.mxu0 0
        %554 = vmatprep.subr.bf16.mxu0 0
        %555 = vmatpush1.bf16.msra.mxu0 0
        %556 = vmatprep.subr.bf16.mxu0 0
        %557 = vmatpush1.bf16.msra.mxu0 0
        %558 = vmatprep.subr.bf16.mxu0 0
        %559 = vmatpush1.bf16.msra.mxu0 0
        %560 = vmatprep.subr.bf16.mxu0 0
        %561 = vmatpush1.bf16.msra.mxu0 0
        %562 = vmatprep.subr.bf16.mxu0 0
        %563 = vmatpush1.bf16.msra.mxu0 0
        %564 = vmatprep.subr.bf16.mxu0 0
        %565 = vmatpush1.bf16.msra.mxu0 0
        %566 = vmatprep.subr.bf16.mxu0 0
        %567 = vmatpush1.bf16.msra.mxu0 0
        %568 = vmatprep.subr.bf16.mxu0 0
        %569 = vmatpush1.bf16.msra.mxu0 0
        %570 = vmatprep.subr.bf16.mxu0 0
        %571 = vmatpush1.bf16.msra.mxu0 0
        %572 = vmatprep.subr.bf16.mxu0 0
        %573 = vmatpush1.bf16.msra.mxu0 0
        %574 = vmatprep.subr.bf16.mxu0 0
        %575 = vmatpush1.bf16.msra.mxu0 0
        %576 = vmatprep.mubr.bf16.mxu0 0
        %577 = vmatmul.mubr.bf16.gmra.mrb[0].mxu0 %v413
        %v578 = vpop.f32.mrb[0].mxu0
        %v579 = vadd.f32 0.0, %v578
        %v580 = vpop.f32.mrb[0].mxu0
        %v581 = vadd.f32 0.0, %v580
        %v582 = vpop.f32.mrb[0].mxu0
        %v583 = vadd.f32 0.0, %v582
        %v584 = vpop.f32.mrb[0].mxu0
        %v585 = vadd.f32 0.0, %v584
        %586 = vdwg.mxu0
        %587 = vmatprep.subr.bf16.mxu0 0
        %588 = vmatpush1.bf16.msra.mxu0 %v347
        %589 = vmatprep.subr.bf16.mxu0 0
        %590 = vmatpush1.bf16.msra.mxu0 %v356
        %591 = vmatprep.subr.bf16.mxu0 0
        %592 = vmatpush1.bf16.msra.mxu0 %v365
        %593 = vmatprep.subr.bf16.mxu0 0
        %594 = vmatpush1.bf16.msra.mxu0 %v374
        %595 = vmatprep.subr.bf16.mxu0 0
        %596 = vmatpush1.bf16.msra.mxu0 0
        %597 = vmatprep.subr.bf16.mxu0 0
        %598 = vmatpush1.bf16.msra.mxu0 0
        %599 = vmatprep.subr.bf16.mxu0 0
        %600 = vmatpush1.bf16.msra.mxu0 0
        %601 = vmatprep.subr.bf16.mxu0 0
        %602 = vmatpush1.bf16.msra.mxu0 0
        %603 = vmatprep.subr.bf16.mxu0 0
        %604 = vmatpush1.bf16.msra.mxu0 0
        %605 = vmatprep.subr.bf16.mxu0 0
        %606 = vmatpush1.bf16.msra.mxu0 0
        %607 = vmatprep.subr.bf16.mxu0 0
        %608 = vmatpush1.bf16.msra.mxu0 0
        %609 = vmatprep.subr.bf16.mxu0 0
        %610 = vmatpush1.bf16.msra.mxu0 0
        %611 = vmatprep.subr.bf16.mxu0 0
        %612 = vmatpush1.bf16.msra.mxu0 0
        %613 = vmatprep.subr.bf16.mxu0 0
        %614 = vmatpush1.bf16.msra.mxu0 0
        %615 = vmatprep.subr.bf16.mxu0 0
        %616 = vmatpush1.bf16.msra.mxu0 0
        %617 = vmatprep.subr.bf16.mxu0 0
        %618 = vmatpush1.bf16.msra.mxu0 0
        %619 = vmatprep.mubr.bf16.mxu0 0
        %620 = vmatmul.mubr.bf16.gmra.mrb[0].mxu0 %v413
        %v621 = vpop.f32.mrb[0].mxu0
        %v622 = vadd.f32 0.0, %v621
        %v623 = vpop.f32.mrb[0].mxu0
        %v624 = vpop.f32.mrb[0].mxu0
        %v625 = vadd.f32 0.0, %v624
        %v626 = vpop.f32.mrb[0].mxu0
        %627 = vdwg.mxu0
        %s628 = scalar_lea.vmem [#allocation2], 8
        %v629 = vld [vmem:[%s628] sm:$0xf]
        %v630 = vld [vmem:[%s628 + $0x4] sm:$0xf]
        %s631 = scalar_lea.vmem %s156, 288 [#allocation5]
        %v632 = vld [vmem:[%s631] sm:$0xff]
        %v633 = vld [vmem:[%s631 + $0x8] sm:$0xff]
        %v634 = vld [vmem:[%s631 + $0x10] sm:$0xff]
        %v635 = vld [vmem:[%s631 + $0x18] sm:$0xff]
        %v636 = vld [vmem:[%s631 + $0x20] sm:$0xf]
        %v637 = vld [vmem:[%s631 + $0x24] sm:$0xff]
        %v638 = vld [vmem:[%s631 + $0x2c] sm:$0xff]
        %v639 = vld [vmem:[%s631 + $0x34] sm:$0xff]
        %v640 = vld [vmem:[%s631 + $0x3c] sm:$0xff]
        %v641 = vld [vmem:[%s631 + $0x44] sm:$0xf]
        %v642 = vld [vmem:[%s631 + $0x48] sm:$0xff]
        %v643 = vld [vmem:[%s631 + $0x50] sm:$0xff]
        %v644 = vld [vmem:[%s631 + $0x58] sm:$0xff]
        %v645 = vld [vmem:[%s631 + $0x60] sm:$0xff]
        %v646 = vld [vmem:[%s631 + $0x68] sm:$0xf]
        %v647 = vld [vmem:[%s631 + $0x6c] sm:$0xff]
        %v648 = vld [vmem:[%s631 + $0x74] sm:$0xff]
        %v649 = vld [vmem:[%s631 + $0x7c] sm:$0xff]
        %v650 = vld [vmem:[%s631 + $0x84] sm:$0xff]
        %v651 = vld [vmem:[%s631 + $0x8c] sm:$0xf]
        %v652 = vld [vmem:[%s631 + $0x90] sm:$0xff]
        %v653 = vld [vmem:[%s631 + $0x98] sm:$0xff]
        %v654 = vld [vmem:[%s631 + $0xa0] sm:$0xff]
        %v655 = vld [vmem:[%s631 + $0xa8] sm:$0xff]
        %v656 = vld [vmem:[%s631 + $0xb0] sm:$0xf]
        %v657 = vld [vmem:[%s631 + $0xb4] sm:$0xff]
        %v658 = vld [vmem:[%s631 + $0xbc] sm:$0xff]
        %v659 = vld [vmem:[%s631 + $0xc4] sm:$0xff]
        %v660 = vld [vmem:[%s631 + $0xcc] sm:$0xff]
        %v661 = vld [vmem:[%s631 + $0xd4] sm:$0xf]
        %v662 = vld [vmem:[%s631 + $0xd8] sm:$0xff]
        %v663 = vld [vmem:[%s631 + $0xe0] sm:$0xff]
        %v664 = vld [vmem:[%s631 + $0xe8] sm:$0xff]
        %v665 = vld [vmem:[%s631 + $0xf0] sm:$0xff]
        %v666 = vld [vmem:[%s631 + $0xf8] sm:$0xf]
        %v667 = vld [vmem:[%s631 + $0xfc] sm:$0xff]
        %v668 = vld [vmem:[%s631 + $0x104] sm:$0xff]
        %v669 = vld [vmem:[%s631 + $0x10c] sm:$0xff]
        %v670 = vld [vmem:[%s631 + $0x114] sm:$0xff]
        %v671 = vld [vmem:[%s631 + $0x11c] sm:$0xf]
        %v674 = vunpack.c.l.b16 %v629
        %v675 = vunpack.c.l.b16 %v630
        %v676 = vpack.c.b16 %v675, %v674
        %v717 = vunpack.c.l.b16 %v632
        %v718 = vunpack.c.h.b16 %v632
        %v719 = vunpack.c.l.b16 %v633
        %v720 = vunpack.c.h.b16 %v633
        %v721 = vunpack.c.l.b16 %v634
        %v722 = vunpack.c.h.b16 %v634
        %v723 = vunpack.c.l.b16 %v635
        %v724 = vunpack.c.h.b16 %v635
        %v725 = vunpack.c.l.b16 %v636
        %v726 = vunpack.c.l.b16 %v637
        %v727 = vunpack.c.h.b16 %v637
        %v728 = vunpack.c.l.b16 %v638
        %v729 = vunpack.c.h.b16 %v638
        %v730 = vunpack.c.l.b16 %v639
        %v731 = vunpack.c.h.b16 %v639
        %v732 = vunpack.c.l.b16 %v640
        %v733 = vunpack.c.h.b16 %v640
        %v734 = vunpack.c.l.b16 %v641
        %v735 = vunpack.c.l.b16 %v642
        %v736 = vunpack.c.h.b16 %v642
        %v737 = vunpack.c.l.b16 %v643
        %v738 = vunpack.c.h.b16 %v643
        %v739 = vunpack.c.l.b16 %v644
        %v740 = vunpack.c.h.b16 %v644
        %v741 = vunpack.c.l.b16 %v645
        %v742 = vunpack.c.h.b16 %v645
        %v743 = vunpack.c.l.b16 %v646
        %v744 = vunpack.c.l.b16 %v647
        %v745 = vunpack.c.h.b16 %v647
        %v746 = vunpack.c.l.b16 %v648
        %v747 = vunpack.c.h.b16 %v648
        %v748 = vunpack.c.l.b16 %v649
        %v749 = vunpack.c.h.b16 %v649
        %v750 = vunpack.c.l.b16 %v650
        %v751 = vunpack.c.h.b16 %v650
        %v752 = vunpack.c.l.b16 %v651
        %v753 = vunpack.c.l.b16 %v652
        %v754 = vunpack.c.h.b16 %v652
        %v755 = vunpack.c.l.b16 %v653
        %v756 = vunpack.c.h.b16 %v653
        %v757 = vunpack.c.l.b16 %v654
        %v758 = vunpack.c.h.b16 %v654
        %v759 = vunpack.c.l.b16 %v655
        %v760 = vunpack.c.h.b16 %v655
        %v761 = vunpack.c.l.b16 %v656
        %v762 = vunpack.c.l.b16 %v657
        %v763 = vunpack.c.h.b16 %v657
        %v764 = vunpack.c.l.b16 %v658
        %v765 = vunpack.c.h.b16 %v658
        %v766 = vunpack.c.l.b16 %v659
        %v767 = vunpack.c.h.b16 %v659
        %v768 = vunpack.c.l.b16 %v660
        %v769 = vunpack.c.h.b16 %v660
        %v770 = vunpack.c.l.b16 %v661
        %v771 = vunpack.c.l.b16 %v662
        %v772 = vunpack.c.h.b16 %v662
        %v773 = vunpack.c.l.b16 %v663
        %v774 = vunpack.c.h.b16 %v663
        %v775 = vunpack.c.l.b16 %v664
        %v776 = vunpack.c.h.b16 %v664
        %v777 = vunpack.c.l.b16 %v665
        %v778 = vunpack.c.h.b16 %v665
        %v779 = vunpack.c.l.b16 %v666
        %v780 = vunpack.c.l.b16 %v667
        %v781 = vunpack.c.h.b16 %v667
        %v782 = vunpack.c.l.b16 %v668
        %v783 = vunpack.c.h.b16 %v668
        %v784 = vunpack.c.l.b16 %v669
        %v785 = vunpack.c.h.b16 %v669
        %v786 = vunpack.c.l.b16 %v670
        %v787 = vunpack.c.h.b16 %v670
        %v788 = vunpack.c.l.b16 %v671
        %v789 = vpack.c.b16 %v726, %v717
        %v790 = vpack.c.b16 %v727, %v718
        %v791 = vpack.c.b16 %v728, %v719
        %v792 = vpack.c.b16 %v729, %v720
        %v793 = vpack.c.b16 %v730, %v721
        %v794 = vpack.c.b16 %v731, %v722
        %v795 = vpack.c.b16 %v732, %v723
        %v796 = vpack.c.b16 %v733, %v724
        %v797 = vpack.c.b16 %v734, %v725
        %v798 = vpack.c.b16 %v744, %v735
        %v799 = vpack.c.b16 %v745, %v736
        %v800 = vpack.c.b16 %v746, %v737
        %v801 = vpack.c.b16 %v747, %v738
        %v802 = vpack.c.b16 %v748, %v739
        %v803 = vpack.c.b16 %v749, %v740
        %v804 = vpack.c.b16 %v750, %v741
        %v805 = vpack.c.b16 %v751, %v742
        %v806 = vpack.c.b16 %v752, %v743
        %v807 = vpack.c.b16 %v762, %v753
        %v808 = vpack.c.b16 %v763, %v754
        %v809 = vpack.c.b16 %v764, %v755
        %v810 = vpack.c.b16 %v765, %v756
        %v811 = vpack.c.b16 %v766, %v757
        %v812 = vpack.c.b16 %v767, %v758
        %v813 = vpack.c.b16 %v768, %v759
        %v814 = vpack.c.b16 %v769, %v760
        %v815 = vpack.c.b16 %v770, %v761
        %v816 = vpack.c.b16 %v780, %v771
        %v817 = vpack.c.b16 %v781, %v772
        %v818 = vpack.c.b16 %v782, %v773
        %v819 = vpack.c.b16 %v783, %v774
        %v820 = vpack.c.b16 %v784, %v775
        %v821 = vpack.c.b16 %v785, %v776
        %v822 = vpack.c.b16 %v786, %v777
        %v823 = vpack.c.b16 %v787, %v778
        %v824 = vpack.c.b16 %v788, %v779
        %v862 = vsel %vm411, %v676, 0
        %864 = vmatprep.subr.bf16.mxu0 %v790
        %865 = vmatpush1.bf16.msra.mxu0 %v789
        %866 = vmatprep.subr.bf16.mxu0 %v799
        %867 = vmatpush1.bf16.msra.mxu0 %v798
        %868 = vmatprep.subr.bf16.mxu0 %v808
        %869 = vmatpush1.bf16.msra.mxu0 %v807
        %870 = vmatprep.subr.bf16.mxu0 %v817
        %871 = vmatpush1.bf16.msra.mxu0 %v816
        %872 = vmatprep.subr.bf16.mxu0 0
        %873 = vmatpush1.bf16.msra.mxu0 0
        %874 = vmatprep.subr.bf16.mxu0 0
        %875 = vmatpush1.bf16.msra.mxu0 0
        %876 = vmatprep.subr.bf16.mxu0 0
        %877 = vmatpush1.bf16.msra.mxu0 0
        %878 = vmatprep.subr.bf16.mxu0 0
        %879 = vmatpush1.bf16.msra.mxu0 0
        %880 = vmatprep.subr.bf16.mxu0 0
        %881 = vmatpush1.bf16.msra.mxu0 0
        %882 = vmatprep.subr.bf16.mxu0 0
        %883 = vmatpush1.bf16.msra.mxu0 0
        %884 = vmatprep.subr.bf16.mxu0 0
        %885 = vmatpush1.bf16.msra.mxu0 0
        %886 = vmatprep.subr.bf16.mxu0 0
        %887 = vmatpush1.bf16.msra.mxu0 0
        %888 = vmatprep.subr.bf16.mxu0 0
        %889 = vmatpush1.bf16.msra.mxu0 0
        %890 = vmatprep.subr.bf16.mxu0 0
        %891 = vmatpush1.bf16.msra.mxu0 0
        %892 = vmatprep.subr.bf16.mxu0 0
        %893 = vmatpush1.bf16.msra.mxu0 0
        %894 = vmatprep.subr.bf16.mxu0 0
        %895 = vmatpush1.bf16.msra.mxu0 0
        %896 = vmatprep.mubr.bf16.mxu0 0
        %897 = vmatmul.mubr.bf16.gmra.mrb[0].mxu0 %v862
        %v898 = vpop.f32.mrb[0].mxu0
        %v899 = vadd.f32 0.0, %v898
        %v900 = vpop.f32.mrb[0].mxu0
        %v901 = vadd.f32 0.0, %v900
        %v902 = vpop.f32.mrb[0].mxu0
        %v903 = vadd.f32 0.0, %v902
        %v904 = vpop.f32.mrb[0].mxu0
        %v905 = vadd.f32 0.0, %v904
        %906 = vdwg.mxu0
        %907 = vmatprep.subr.bf16.mxu0 %v792
        %908 = vmatpush1.bf16.msra.mxu0 %v791
        %909 = vmatprep.subr.bf16.mxu0 %v801
        %910 = vmatpush1.bf16.msra.mxu0 %v800
        %911 = vmatprep.subr.bf16.mxu0 %v810
        %912 = vmatpush1.bf16.msra.mxu0 %v809
        %913 = vmatprep.subr.bf16.mxu0 %v819
        %914 = vmatpush1.bf16.msra.mxu0 %v818
        %915 = vmatprep.subr.bf16.mxu0 0
        %916 = vmatpush1.bf16.msra.mxu0 0
        %917 = vmatprep.subr.bf16.mxu0 0
        %918 = vmatpush1.bf16.msra.mxu0 0
        %919 = vmatprep.subr.bf16.mxu0 0
        %920 = vmatpush1.bf16.msra.mxu0 0
        %921 = vmatprep.subr.bf16.mxu0 0
        %922 = vmatpush1.bf16.msra.mxu0 0
        %923 = vmatprep.subr.bf16.mxu0 0
        %924 = vmatpush1.bf16.msra.mxu0 0
        %925 = vmatprep.subr.bf16.mxu0 0
        %926 = vmatpush1.bf16.msra.mxu0 0
        %927 = vmatprep.subr.bf16.mxu0 0
        %928 = vmatpush1.bf16.msra.mxu0 0
        %929 = vmatprep.subr.bf16.mxu0 0
        %930 = vmatpush1.bf16.msra.mxu0 0
        %931 = vmatprep.subr.bf16.mxu0 0
        %932 = vmatpush1.bf16.msra.mxu0 0
        %933 = vmatprep.subr.bf16.mxu0 0
        %934 = vmatpush1.bf16.msra.mxu0 0
        %935 = vmatprep.subr.bf16.mxu0 0
        %936 = vmatpush1.bf16.msra.mxu0 0
        %937 = vmatprep.subr.bf16.mxu0 0
        %938 = vmatpush1.bf16.msra.mxu0 0
        %939 = vmatprep.mubr.bf16.mxu0 0
        %940 = vmatmul.mubr.bf16.gmra.mrb[0].mxu0 %v862
        %v941 = vpop.f32.mrb[0].mxu0
        %v942 = vadd.f32 0.0, %v941
        %v943 = vpop.f32.mrb[0].mxu0
        %v944 = vadd.f32 0.0, %v943
        %v945 = vpop.f32.mrb[0].mxu0
        %v946 = vadd.f32 0.0, %v945
        %v947 = vpop.f32.mrb[0].mxu0
        %v948 = vadd.f32 0.0, %v947
        %949 = vdwg.mxu0
        %950 = vmatprep.subr.bf16.mxu0 %v794
        %951 = vmatpush1.bf16.msra.mxu0 %v793
        %952 = vmatprep.subr.bf16.mxu0 %v803
        %953 = vmatpush1.bf16.msra.mxu0 %v802
        %954 = vmatprep.subr.bf16.mxu0 %v812
        %955 = vmatpush1.bf16.msra.mxu0 %v811
        %956 = vmatprep.subr.bf16.mxu0 %v821
        %957 = vmatpush1.bf16.msra.mxu0 %v820
        %958 = vmatprep.subr.bf16.mxu0 0
        %959 = vmatpush1.bf16.msra.mxu0 0
        %960 = vmatprep.subr.bf16.mxu0 0
        %961 = vmatpush1.bf16.msra.mxu0 0
        %962 = vmatprep.subr.bf16.mxu0 0
        %963 = vmatpush1.bf16.msra.mxu0 0
        %964 = vmatprep.subr.bf16.mxu0 0
        %965 = vmatpush1.bf16.msra.mxu0 0
        %966 = vmatprep.subr.bf16.mxu0 0
        %967 = vmatpush1.bf16.msra.mxu0 0
        %968 = vmatprep.subr.bf16.mxu0 0
        %969 = vmatpush1.bf16.msra.mxu0 0
        %970 = vmatprep.subr.bf16.mxu0 0
        %971 = vmatpush1.bf16.msra.mxu0 0
        %972 = vmatprep.subr.bf16.mxu0 0
        %973 = vmatpush1.bf16.msra.mxu0 0
        %974 = vmatprep.subr.bf16.mxu0 0
        %975 = vmatpush1.bf16.msra.mxu0 0
        %976 = vmatprep.subr.bf16.mxu0 0
        %977 = vmatpush1.bf16.msra.mxu0 0
        %978 = vmatprep.subr.bf16.mxu0 0
        %979 = vmatpush1.bf16.msra.mxu0 0
        %980 = vmatprep.subr.bf16.mxu0 0
        %981 = vmatpush1.bf16.msra.mxu0 0
        %982 = vmatprep.mubr.bf16.mxu0 0
        %983 = vmatmul.mubr.bf16.gmra.mrb[0].mxu0 %v862
        %v984 = vpop.f32.mrb[0].mxu0
        %v985 = vadd.f32 0.0, %v984
        %v986 = vpop.f32.mrb[0].mxu0
        %v987 = vadd.f32 0.0, %v986
        %v988 = vpop.f32.mrb[0].mxu0
        %v989 = vadd.f32 0.0, %v988
        %v990 = vpop.f32.mrb[0].mxu0
        %v991 = vadd.f32 0.0, %v990
        %992 = vdwg.mxu0
        %993 = vmatprep.subr.bf16.mxu0 %v796
        %994 = vmatpush1.bf16.msra.mxu0 %v795
        %995 = vmatprep.subr.bf16.mxu0 %v805
        %996 = vmatpush1.bf16.msra.mxu0 %v804
        %997 = vmatprep.subr.bf16.mxu0 %v814
        %998 = vmatpush1.bf16.msra.mxu0 %v813
        %999 = vmatprep.subr.bf16.mxu0 %v823
        %1000 = vmatpush1.bf16.msra.mxu0 %v822
        %1001 = vmatprep.subr.bf16.mxu0 0
        %1002 = vmatpush1.bf16.msra.mxu0 0
        %1003 = vmatprep.subr.bf16.mxu0 0
        %1004 = vmatpush1.bf16.msra.mxu0 0
        %1005 = vmatprep.subr.bf16.mxu0 0
        %1006 = vmatpush1.bf16.msra.mxu0 0
        %1007 = vmatprep.subr.bf16.mxu0 0
        %1008 = vmatpush1.bf16.msra.mxu0 0
        %1009 = vmatprep.subr.bf16.mxu0 0
        %1010 = vmatpush1.bf16.msra.mxu0 0
        %1011 = vmatprep.subr.bf16.mxu0 0
        %1012 = vmatpush1.bf16.msra.mxu0 0
        %1013 = vmatprep.subr.bf16.mxu0 0
        %1014 = vmatpush1.bf16.msra.mxu0 0
        %1015 = vmatprep.subr.bf16.mxu0 0
        %1016 = vmatpush1.bf16.msra.mxu0 0
        %1017 = vmatprep.subr.bf16.mxu0 0
        %1018 = vmatpush1.bf16.msra.mxu0 0
        %1019 = vmatprep.subr.bf16.mxu0 0
        %1020 = vmatpush1.bf16.msra.mxu0 0
        %1021 = vmatprep.subr.bf16.mxu0 0
        %1022 = vmatpush1.bf16.msra.mxu0 0
        %1023 = vmatprep.subr.bf16.mxu0 0
        %1024 = vmatpush1.bf16.msra.mxu0 0
        %1025 = vmatprep.mubr.bf16.mxu0 0
        %1026 = vmatmul.mubr.bf16.gmra.mrb[0].mxu0 %v862
        %v1027 = vpop.f32.mrb[0].mxu0
        %v1028 = vadd.f32 0.0, %v1027
        %v1029 = vpop.f32.mrb[0].mxu0
        %v1030 = vadd.f32 0.0, %v1029
        %v1031 = vpop.f32.mrb[0].mxu0
        %v1032 = vadd.f32 0.0, %v1031
        %v1033 = vpop.f32.mrb[0].mxu0
        %v1034 = vadd.f32 0.0, %v1033
        %1035 = vdwg.mxu0
        %1036 = vmatprep.subr.bf16.mxu0 0
        %1037 = vmatpush1.bf16.msra.mxu0 %v797
        %1038 = vmatprep.subr.bf16.mxu0 0
        %1039 = vmatpush1.bf16.msra.mxu0 %v806
        %1040 = vmatprep.subr.bf16.mxu0 0
        %1041 = vmatpush1.bf16.msra.mxu0 %v815
        %1042 = vmatprep.subr.bf16.mxu0 0
        %1043 = vmatpush1.bf16.msra.mxu0 %v824
        %1044 = vmatprep.subr.bf16.mxu0 0
        %1045 = vmatpush1.bf16.msra.mxu0 0
        %1046 = vmatprep.subr.bf16.mxu0 0
        %1047 = vmatpush1.bf16.msra.mxu0 0
        %1048 = vmatprep.subr.bf16.mxu0 0
        %1049 = vmatpush1.bf16.msra.mxu0 0
        %1050 = vmatprep.subr.bf16.mxu0 0
        %1051 = vmatpush1.bf16.msra.mxu0 0
        %1052 = vmatprep.subr.bf16.mxu0 0
        %1053 = vmatpush1.bf16.msra.mxu0 0
        %1054 = vmatprep.subr.bf16.mxu0 0
        %1055 = vmatpush1.bf16.msra.mxu0 0
        %1056 = vmatprep.subr.bf16.mxu0 0
        %1057 = vmatpush1.bf16.msra.mxu0 0
        %1058 = vmatprep.subr.bf16.mxu0 0
        %1059 = vmatpush1.bf16.msra.mxu0 0
        %1060 = vmatprep.subr.bf16.mxu0 0
        %1061 = vmatpush1.bf16.msra.mxu0 0
        %1062 = vmatprep.subr.bf16.mxu0 0
        %1063 = vmatpush1.bf16.msra.mxu0 0
        %1064 = vmatprep.subr.bf16.mxu0 0
        %1065 = vmatpush1.bf16.msra.mxu0 0
        %1066 = vmatprep.subr.bf16.mxu0 0
        %1067 = vmatpush1.bf16.msra.mxu0 0
        %1068 = vmatprep.mubr.bf16.mxu0 0
        %1069 = vmatmul.mubr.bf16.gmra.mrb[0].mxu0 %v862
        %v1070 = vpop.f32.mrb[0].mxu0
        %v1071 = vadd.f32 0.0, %v1070
        %v1072 = vpop.f32.mrb[0].mxu0
        %v1073 = vpop.f32.mrb[0].mxu0
        %v1074 = vadd.f32 0.0, %v1073
        %v1075 = vpop.f32.mrb[0].mxu0
        %1076 = vdwg.mxu0
        %s1077 = scalar_lea.vmem [#allocation2], 16
        %v1078 = vld [vmem:[%s1077] sm:$0xf]
        %v1079 = vld [vmem:[%s1077 + $0x4] sm:$0xf]
        %s1080 = scalar_lea.vmem %s156, 576 [#allocation5]
        %v1081 = vld [vmem:[%s1080] sm:$0xff]
        %v1082 = vld [vmem:[%s1080 + $0x8] sm:$0xff]
        %v1083 = vld [vmem:[%s1080 + $0x10] sm:$0xff]
        %v1084 = vld [vmem:[%s1080 + $0x18] sm:$0xff]
        %v1085 = vld [vmem:[%s1080 + $0x20] sm:$0xf]
        %v1086 = vld [vmem:[%s1080 + $0x24] sm:$0xff]
        %v1087 = vld [vmem:[%s1080 + $0x2c] sm:$0xff]
        %v1088 = vld [vmem:[%s1080 + $0x34] sm:$0xff]
        %v1089 = vld [vmem:[%s1080 + $0x3c] sm:$0xff]
        %v1090 = vld [vmem:[%s1080 + $0x44] sm:$0xf]
        %v1091 = vld [vmem:[%s1080 + $0x48] sm:$0xff]
        %v1092 = vld [vmem:[%s1080 + $0x50] sm:$0xff]
        %v1093 = vld [vmem:[%s1080 + $0x58] sm:$0xff]
        %v1094 = vld [vmem:[%s1080 + $0x60] sm:$0xff]
        %v1095 = vld [vmem:[%s1080 + $0x68] sm:$0xf]
        %v1096 = vld [vmem:[%s1080 + $0x6c] sm:$0xff]
        %v1097 = vld [vmem:[%s1080 + $0x74] sm:$0xff]
        %v1098 = vld [vmem:[%s1080 + $0x7c] sm:$0xff]
        %v1099 = vld [vmem:[%s1080 + $0x84] sm:$0xff]
        %v1100 = vld [vmem:[%s1080 + $0x8c] sm:$0xf]
        %v1101 = vld [vmem:[%s1080 + $0x90] sm:$0xff]
        %v1102 = vld [vmem:[%s1080 + $0x98] sm:$0xff]
        %v1103 = vld [vmem:[%s1080 + $0xa0] sm:$0xff]
        %v1104 = vld [vmem:[%s1080 + $0xa8] sm:$0xff]
        %v1105 = vld [vmem:[%s1080 + $0xb0] sm:$0xf]
        %v1106 = vld [vmem:[%s1080 + $0xb4] sm:$0xff]
        %v1107 = vld [vmem:[%s1080 + $0xbc] sm:$0xff]
        %v1108 = vld [vmem:[%s1080 + $0xc4] sm:$0xff]
        %v1109 = vld [vmem:[%s1080 + $0xcc] sm:$0xff]
        %v1110 = vld [vmem:[%s1080 + $0xd4] sm:$0xf]
        %v1111 = vld [vmem:[%s1080 + $0xd8] sm:$0xff]
        %v1112 = vld [vmem:[%s1080 + $0xe0] sm:$0xff]
        %v1113 = vld [vmem:[%s1080 + $0xe8] sm:$0xff]
        %v1114 = vld [vmem:[%s1080 + $0xf0] sm:$0xff]
        %v1115 = vld [vmem:[%s1080 + $0xf8] sm:$0xf]
        %v1116 = vld [vmem:[%s1080 + $0xfc] sm:$0xff]
        %v1117 = vld [vmem:[%s1080 + $0x104] sm:$0xff]
        %v1118 = vld [vmem:[%s1080 + $0x10c] sm:$0xff]
        %v1119 = vld [vmem:[%s1080 + $0x114] sm:$0xff]
        %v1120 = vld [vmem:[%s1080 + $0x11c] sm:$0xf]
        %v1123 = vunpack.c.l.b16 %v1078
        %v1124 = vunpack.c.l.b16 %v1079
        %v1125 = vpack.c.b16 %v1124, %v1123
        %v1166 = vunpack.c.l.b16 %v1081
        %v1167 = vunpack.c.h.b16 %v1081
        %v1168 = vunpack.c.l.b16 %v1082
        %v1169 = vunpack.c.h.b16 %v1082
        %v1170 = vunpack.c.l.b16 %v1083
        %v1171 = vunpack.c.h.b16 %v1083
        %v1172 = vunpack.c.l.b16 %v1084
        %v1173 = vunpack.c.h.b16 %v1084
        %v1174 = vunpack.c.l.b16 %v1085
        %v1175 = vunpack.c.l.b16 %v1086
        %v1176 = vunpack.c.h.b16 %v1086
        %v1177 = vunpack.c.l.b16 %v1087
        %v1178 = vunpack.c.h.b16 %v1087
        %v1179 = vunpack.c.l.b16 %v1088
        %v1180 = vunpack.c.h.b16 %v1088
        %v1181 = vunpack.c.l.b16 %v1089
        %v1182 = vunpack.c.h.b16 %v1089
        %v1183 = vunpack.c.l.b16 %v1090
        %v1184 = vunpack.c.l.b16 %v1091
        %v1185 = vunpack.c.h.b16 %v1091
        %v1186 = vunpack.c.l.b16 %v1092
        %v1187 = vunpack.c.h.b16 %v1092
        %v1188 = vunpack.c.l.b16 %v1093
        %v1189 = vunpack.c.h.b16 %v1093
        %v1190 = vunpack.c.l.b16 %v1094
        %v1191 = vunpack.c.h.b16 %v1094
        %v1192 = vunpack.c.l.b16 %v1095
        %v1193 = vunpack.c.l.b16 %v1096
        %v1194 = vunpack.c.h.b16 %v1096
        %v1195 = vunpack.c.l.b16 %v1097
        %v1196 = vunpack.c.h.b16 %v1097
        %v1197 = vunpack.c.l.b16 %v1098
        %v1198 = vunpack.c.h.b16 %v1098
        %v1199 = vunpack.c.l.b16 %v1099
        %v1200 = vunpack.c.h.b16 %v1099
        %v1201 = vunpack.c.l.b16 %v1100
        %v1202 = vunpack.c.l.b16 %v1101
        %v1203 = vunpack.c.h.b16 %v1101
        %v1204 = vunpack.c.l.b16 %v1102
        %v1205 = vunpack.c.h.b16 %v1102
        %v1206 = vunpack.c.l.b16 %v1103
        %v1207 = vunpack.c.h.b16 %v1103
        %v1208 = vunpack.c.l.b16 %v1104
        %v1209 = vunpack.c.h.b16 %v1104
        %v1210 = vunpack.c.l.b16 %v1105
        %v1211 = vunpack.c.l.b16 %v1106
        %v1212 = vunpack.c.h.b16 %v1106
        %v1213 = vunpack.c.l.b16 %v1107
        %v1214 = vunpack.c.h.b16 %v1107
        %v1215 = vunpack.c.l.b16 %v1108
        %v1216 = vunpack.c.h.b16 %v1108
        %v1217 = vunpack.c.l.b16 %v1109
        %v1218 = vunpack.c.h.b16 %v1109
        %v1219 = vunpack.c.l.b16 %v1110
        %v1220 = vunpack.c.l.b16 %v1111
        %v1221 = vunpack.c.h.b16 %v1111
        %v1222 = vunpack.c.l.b16 %v1112
        %v1223 = vunpack.c.h.b16 %v1112
        %v1224 = vunpack.c.l.b16 %v1113
        %v1225 = vunpack.c.h.b16 %v1113
        %v1226 = vunpack.c.l.b16 %v1114
        %v1227 = vunpack.c.h.b16 %v1114
        %v1228 = vunpack.c.l.b16 %v1115
        %v1229 = vunpack.c.l.b16 %v1116
        %v1230 = vunpack.c.h.b16 %v1116
        %v1231 = vunpack.c.l.b16 %v1117
        %v1232 = vunpack.c.h.b16 %v1117
        %v1233 = vunpack.c.l.b16 %v1118
        %v1234 = vunpack.c.h.b16 %v1118
        %v1235 = vunpack.c.l.b16 %v1119
        %v1236 = vunpack.c.h.b16 %v1119
        %v1237 = vunpack.c.l.b16 %v1120
        %v1238 = vpack.c.b16 %v1175, %v1166
        %v1239 = vpack.c.b16 %v1176, %v1167
        %v1240 = vpack.c.b16 %v1177, %v1168
        %v1241 = vpack.c.b16 %v1178, %v1169
        %v1242 = vpack.c.b16 %v1179, %v1170
        %v1243 = vpack.c.b16 %v1180, %v1171
        %v1244 = vpack.c.b16 %v1181, %v1172
        %v1245 = vpack.c.b16 %v1182, %v1173
        %v1246 = vpack.c.b16 %v1183, %v1174
        %v1247 = vpack.c.b16 %v1193, %v1184
        %v1248 = vpack.c.b16 %v1194, %v1185
        %v1249 = vpack.c.b16 %v1195, %v1186
        %v1250 = vpack.c.b16 %v1196, %v1187
        %v1251 = vpack.c.b16 %v1197, %v1188
        %v1252 = vpack.c.b16 %v1198, %v1189
        %v1253 = vpack.c.b16 %v1199, %v1190
        %v1254 = vpack.c.b16 %v1200, %v1191
        %v1255 = vpack.c.b16 %v1201, %v1192
        %v1256 = vpack.c.b16 %v1211, %v1202
        %v1257 = vpack.c.b16 %v1212, %v1203
        %v1258 = vpack.c.b16 %v1213, %v1204
        %v1259 = vpack.c.b16 %v1214, %v1205
        %v1260 = vpack.c.b16 %v1215, %v1206
        %v1261 = vpack.c.b16 %v1216, %v1207
        %v1262 = vpack.c.b16 %v1217, %v1208
        %v1263 = vpack.c.b16 %v1218, %v1209
        %v1264 = vpack.c.b16 %v1219, %v1210
        %v1265 = vpack.c.b16 %v1229, %v1220
        %v1266 = vpack.c.b16 %v1230, %v1221
        %v1267 = vpack.c.b16 %v1231, %v1222
        %v1268 = vpack.c.b16 %v1232, %v1223
        %v1269 = vpack.c.b16 %v1233, %v1224
        %v1270 = vpack.c.b16 %v1234, %v1225
        %v1271 = vpack.c.b16 %v1235, %v1226
        %v1272 = vpack.c.b16 %v1236, %v1227
        %v1273 = vpack.c.b16 %v1237, %v1228
        %v1311 = vsel %vm411, %v1125, 0
        %1313 = vmatprep.subr.bf16.mxu0 %v1239
        %1314 = vmatpush1.bf16.msra.mxu0 %v1238
        %1315 = vmatprep.subr.bf16.mxu0 %v1248
        %1316 = vmatpush1.bf16.msra.mxu0 %v1247
        %1317 = vmatprep.subr.bf16.mxu0 %v1257
        %1318 = vmatpush1.bf16.msra.mxu0 %v1256
        %1319 = vmatprep.subr.bf16.mxu0 %v1266
        %1320 = vmatpush1.bf16.msra.mxu0 %v1265
        %1321 = vmatprep.subr.bf16.mxu0 0
        %1322 = vmatpush1.bf16.msra.mxu0 0
        %1323 = vmatprep.subr.bf16.mxu0 0
        %1324 = vmatpush1.bf16.msra.mxu0 0
        %1325 = vmatprep.subr.bf16.mxu0 0
        %1326 = vmatpush1.bf16.msra.mxu0 0
        %1327 = vmatprep.subr.bf16.mxu0 0
        %1328 = vmatpush1.bf16.msra.mxu0 0
        %1329 = vmatprep.subr.bf16.mxu0 0
        %1330 = vmatpush1.bf16.msra.mxu0 0
        %1331 = vmatprep.subr.bf16.mxu0 0
        %1332 = vmatpush1.bf16.msra.mxu0 0
        %1333 = vmatprep.subr.bf16.mxu0 0
        %1334 = vmatpush1.bf16.msra.mxu0 0
        %1335 = vmatprep.subr.bf16.mxu0 0
        %1336 = vmatpush1.bf16.msra.mxu0 0
        %1337 = vmatprep.subr.bf16.mxu0 0
        %1338 = vmatpush1.bf16.msra.mxu0 0
        %1339 = vmatprep.subr.bf16.mxu0 0
        %1340 = vmatpush1.bf16.msra.mxu0 0
        %1341 = vmatprep.subr.bf16.mxu0 0
        %1342 = vmatpush1.bf16.msra.mxu0 0
        %1343 = vmatprep.subr.bf16.mxu0 0
        %1344 = vmatpush1.bf16.msra.mxu0 0
        %1345 = vmatprep.mubr.bf16.mxu0 0
        %1346 = vmatmul.mubr.bf16.gmra.mrb[0].mxu0 %v1311
        %v1347 = vpop.f32.mrb[0].mxu0
        %v1348 = vadd.f32 0.0, %v1347
        %v1349 = vpop.f32.mrb[0].mxu0
        %v1350 = vadd.f32 0.0, %v1349
        %v1351 = vpop.f32.mrb[0].mxu0
        %v1352 = vadd.f32 0.0, %v1351
        %v1353 = vpop.f32.mrb[0].mxu0
        %v1354 = vadd.f32 0.0, %v1353
        %1355 = vdwg.mxu0
        %1356 = vmatprep.subr.bf16.mxu0 %v1241
        %1357 = vmatpush1.bf16.msra.mxu0 %v1240
        %1358 = vmatprep.subr.bf16.mxu0 %v1250
        %1359 = vmatpush1.bf16.msra.mxu0 %v1249
        %1360 = vmatprep.subr.bf16.mxu0 %v1259
        %1361 = vmatpush1.bf16.msra.mxu0 %v1258
        %1362 = vmatprep.subr.bf16.mxu0 %v1268
        %1363 = vmatpush1.bf16.msra.mxu0 %v1267
        %1364 = vmatprep.subr.bf16.mxu0 0
        %1365 = vmatpush1.bf16.msra.mxu0 0
        %1366 = vmatprep.subr.bf16.mxu0 0
        %1367 = vmatpush1.bf16.msra.mxu0 0
        %1368 = vmatprep.subr.bf16.mxu0 0
        %1369 = vmatpush1.bf16.msra.mxu0 0
        %1370 = vmatprep.subr.bf16.mxu0 0
        %1371 = vmatpush1.bf16.msra.mxu0 0
        %1372 = vmatprep.subr.bf16.mxu0 0
        %1373 = vmatpush1.bf16.msra.mxu0 0
        %1374 = vmatprep.subr.bf16.mxu0 0
        %1375 = vmatpush1.bf16.msra.mxu0 0
        %1376 = vmatprep.subr.bf16.mxu0 0
        %1377 = vmatpush1.bf16.msra.mxu0 0
        %1378 = vmatprep.subr.bf16.mxu0 0
        %1379 = vmatpush1.bf16.msra.mxu0 0
        %1380 = vmatprep.subr.bf16.mxu0 0
        %1381 = vmatpush1.bf16.msra.mxu0 0
        %1382 = vmatprep.subr.bf16.mxu0 0
        %1383 = vmatpush1.bf16.msra.mxu0 0
        %1384 = vmatprep.subr.bf16.mxu0 0
        %1385 = vmatpush1.bf16.msra.mxu0 0
        %1386 = vmatprep.subr.bf16.mxu0 0
        %1387 = vmatpush1.bf16.msra.mxu0 0
        %1388 = vmatprep.mubr.bf16.mxu0 0
        %1389 = vmatmul.mubr.bf16.gmra.mrb[0].mxu0 %v1311
        %v1390 = vpop.f32.mrb[0].mxu0
        %v1391 = vadd.f32 0.0, %v1390
        %v1392 = vpop.f32.mrb[0].mxu0
        %v1393 = vadd.f32 0.0, %v1392
        %v1394 = vpop.f32.mrb[0].mxu0
        %v1395 = vadd.f32 0.0, %v1394
        %v1396 = vpop.f32.mrb[0].mxu0
        %v1397 = vadd.f32 0.0, %v1396
        %1398 = vdwg.mxu0
        %1399 = vmatprep.subr.bf16.mxu0 %v1243
        %1400 = vmatpush1.bf16.msra.mxu0 %v1242
        %1401 = vmatprep.subr.bf16.mxu0 %v1252
        %1402 = vmatpush1.bf16.msra.mxu0 %v1251
        %1403 = vmatprep.subr.bf16.mxu0 %v1261
        %1404 = vmatpush1.bf16.msra.mxu0 %v1260
        %1405 = vmatprep.subr.bf16.mxu0 %v1270
        %1406 = vmatpush1.bf16.msra.mxu0 %v1269
        %1407 = vmatprep.subr.bf16.mxu0 0
        %1408 = vmatpush1.bf16.msra.mxu0 0
        %1409 = vmatprep.subr.bf16.mxu0 0
        %1410 = vmatpush1.bf16.msra.mxu0 0
        %1411 = vmatprep.subr.bf16.mxu0 0
        %1412 = vmatpush1.bf16.msra.mxu0 0
        %1413 = vmatprep.subr.bf16.mxu0 0
        %1414 = vmatpush1.bf16.msra.mxu0 0
        %1415 = vmatprep.subr.bf16.mxu0 0
        %1416 = vmatpush1.bf16.msra.mxu0 0
        %1417 = vmatprep.subr.bf16.mxu0 0
        %1418 = vmatpush1.bf16.msra.mxu0 0
        %1419 = vmatprep.subr.bf16.mxu0 0
        %1420 = vmatpush1.bf16.msra.mxu0 0
        %1421 = vmatprep.subr.bf16.mxu0 0
        %1422 = vmatpush1.bf16.msra.mxu0 0
        %1423 = vmatprep.subr.bf16.mxu0 0
        %1424 = vmatpush1.bf16.msra.mxu0 0
        %1425 = vmatprep.subr.bf16.mxu0 0
        %1426 = vmatpush1.bf16.msra.mxu0 0
        %1427 = vmatprep.subr.bf16.mxu0 0
        %1428 = vmatpush1.bf16.msra.mxu0 0
        %1429 = vmatprep.subr.bf16.mxu0 0
        %1430 = vmatpush1.bf16.msra.mxu0 0
        %1431 = vmatprep.mubr.bf16.mxu0 0
        %1432 = vmatmul.mubr.bf16.gmra.mrb[0].mxu0 %v1311
        %v1433 = vpop.f32.mrb[0].mxu0
        %v1434 = vadd.f32 0.0, %v1433
        %v1435 = vpop.f32.mrb[0].mxu0
        %v1436 = vadd.f32 0.0, %v1435
        %v1437 = vpop.f32.mrb[0].mxu0
        %v1438 = vadd.f32 0.0, %v1437
        %v1439 = vpop.f32.mrb[0].mxu0
        %v1440 = vadd.f32 0.0, %v1439
        %1441 = vdwg.mxu0
        %1442 = vmatprep.subr.bf16.mxu0 %v1245
        %1443 = vmatpush1.bf16.msra.mxu0 %v1244
        %1444 = vmatprep.subr.bf16.mxu0 %v1254
        %1445 = vmatpush1.bf16.msra.mxu0 %v1253
        %1446 = vmatprep.subr.bf16.mxu0 %v1263
        %1447 = vmatpush1.bf16.msra.mxu0 %v1262
        %1448 = vmatprep.subr.bf16.mxu0 %v1272
        %1449 = vmatpush1.bf16.msra.mxu0 %v1271
        %1450 = vmatprep.subr.bf16.mxu0 0
        %1451 = vmatpush1.bf16.msra.mxu0 0
        %1452 = vmatprep.subr.bf16.mxu0 0
        %1453 = vmatpush1.bf16.msra.mxu0 0
        %1454 = vmatprep.subr.bf16.mxu0 0
        %1455 = vmatpush1.bf16.msra.mxu0 0
        %1456 = vmatprep.subr.bf16.mxu0 0
        %1457 = vmatpush1.bf16.msra.mxu0 0
        %1458 = vmatprep.subr.bf16.mxu0 0
        %1459 = vmatpush1.bf16.msra.mxu0 0
        %1460 = vmatprep.subr.bf16.mxu0 0
        %1461 = vmatpush1.bf16.msra.mxu0 0
        %1462 = vmatprep.subr.bf16.mxu0 0
        %1463 = vmatpush1.bf16.msra.mxu0 0
        %1464 = vmatprep.subr.bf16.mxu0 0
        %1465 = vmatpush1.bf16.msra.mxu0 0
        %1466 = vmatprep.subr.bf16.mxu0 0
        %1467 = vmatpush1.bf16.msra.mxu0 0
        %1468 = vmatprep.subr.bf16.mxu0 0
        %1469 = vmatpush1.bf16.msra.mxu0 0
        %1470 = vmatprep.subr.bf16.mxu0 0
        %1471 = vmatpush1.bf16.msra.mxu0 0
        %1472 = vmatprep.subr.bf16.mxu0 0
        %1473 = vmatpush1.bf16.msra.mxu0 0
        %1474 = vmatprep.mubr.bf16.mxu0 0
        %1475 = vmatmul.mubr.bf16.gmra.mrb[0].mxu0 %v1311
        %v1476 = vpop.f32.mrb[0].mxu0
        %v1477 = vadd.f32 0.0, %v1476
        %v1478 = vpop.f32.mrb[0].mxu0
        %v1479 = vadd.f32 0.0, %v1478
        %v1480 = vpop.f32.mrb[0].mxu0
        %v1481 = vadd.f32 0.0, %v1480
        %v1482 = vpop.f32.mrb[0].mxu0
        %v1483 = vadd.f32 0.0, %v1482
        %1484 = vdwg.mxu0
        %1485 = vmatprep.subr.bf16.mxu0 0
        %1486 = vmatpush1.bf16.msra.mxu0 %v1246
        %1487 = vmatprep.subr.bf16.mxu0 0
        %1488 = vmatpush1.bf16.msra.mxu0 %v1255
        %1489 = vmatprep.subr.bf16.mxu0 0
        %1490 = vmatpush1.bf16.msra.mxu0 %v1264
        %1491 = vmatprep.subr.bf16.mxu0 0
        %1492 = vmatpush1.bf16.msra.mxu0 %v1273
        %1493 = vmatprep.subr.bf16.mxu0 0
        %1494 = vmatpush1.bf16.msra.mxu0 0
        %1495 = vmatprep.subr.bf16.mxu0 0
        %1496 = vmatpush1.bf16.msra.mxu0 0
        %1497 = vmatprep.subr.bf16.mxu0 0
        %1498 = vmatpush1.bf16.msra.mxu0 0
        %1499 = vmatprep.subr.bf16.mxu0 0
        %1500 = vmatpush1.bf16.msra.mxu0 0
        %1501 = vmatprep.subr.bf16.mxu0 0
        %1502 = vmatpush1.bf16.msra.mxu0 0
        %1503 = vmatprep.subr.bf16.mxu0 0
        %1504 = vmatpush1.bf16.msra.mxu0 0
        %1505 = vmatprep.subr.bf16.mxu0 0
        %1506 = vmatpush1.bf16.msra.mxu0 0
        %1507 = vmatprep.subr.bf16.mxu0 0
        %1508 = vmatpush1.bf16.msra.mxu0 0
        %1509 = vmatprep.subr.bf16.mxu0 0
        %1510 = vmatpush1.bf16.msra.mxu0 0
        %1511 = vmatprep.subr.bf16.mxu0 0
        %1512 = vmatpush1.bf16.msra.mxu0 0
        %1513 = vmatprep.subr.bf16.mxu0 0
        %1514 = vmatpush1.bf16.msra.mxu0 0
        %1515 = vmatprep.subr.bf16.mxu0 0
        %1516 = vmatpush1.bf16.msra.mxu0 0
        %1517 = vmatprep.mubr.bf16.mxu0 0
        %1518 = vmatmul.mubr.bf16.gmra.mrb[0].mxu0 %v1311
        %v1519 = vpop.f32.mrb[0].mxu0
        %v1520 = vadd.f32 0.0, %v1519
        %v1521 = vpop.f32.mrb[0].mxu0
        %v1522 = vpop.f32.mrb[0].mxu0
        %v1523 = vadd.f32 0.0, %v1522
        %v1524 = vpop.f32.mrb[0].mxu0
        %1525 = vdwg.mxu0
        %v1526 = vmul.f32 %v450, %v450
        %v1527 = vmul.f32 %v452, %v452
        %v1528 = vmul.f32 %v493, %v493
        %v1529 = vmul.f32 %v495, %v495
        %v1530 = vmul.f32 %v536, %v536
        %v1531 = vmul.f32 %v538, %v538
        %v1532 = vmul.f32 %v579, %v579
        %v1533 = vmul.f32 %v581, %v581
        %v1534 = vmul.f32 %v622, %v622
        %v1535 = vmul.f32 %v454, %v454
        %v1536 = vmul.f32 %v456, %v456
        %v1537 = vmul.f32 %v497, %v497
        %v1538 = vmul.f32 %v499, %v499
        %v1539 = vmul.f32 %v540, %v540
        %v1540 = vmul.f32 %v542, %v542
        %v1541 = vmul.f32 %v583, %v583
        %v1542 = vmul.f32 %v585, %v585
        %v1543 = vmul.f32 %v625, %v625
        %v1544 = vrot.slane %v1526, 4
        %v1545 = vadd.f32 %v1526, %v1544
        %v1546 = vrot.slane %v1545, 2
        %v1547 = vadd.f32 %v1545, %v1546
        %v1548 = vrot.slane %v1547, 1
        %v1549 = vadd.f32 %v1547, %v1548
        %v1550 = vrot.slane %v1527, 4
        %v1551 = vadd.f32 %v1527, %v1550
        %v1552 = vrot.slane %v1551, 2
        %v1553 = vadd.f32 %v1551, %v1552
        %v1554 = vrot.slane %v1553, 1
        %v1555 = vadd.f32 %v1553, %v1554
        %v1556 = vrot.slane %v1528, 4
        %v1557 = vadd.f32 %v1528, %v1556
        %v1558 = vrot.slane %v1557, 2
        %v1559 = vadd.f32 %v1557, %v1558
        %v1560 = vrot.slane %v1559, 1
        %v1561 = vadd.f32 %v1559, %v1560
        %v1562 = vrot.slane %v1529, 4
        %v1563 = vadd.f32 %v1529, %v1562
        %v1564 = vrot.slane %v1563, 2
        %v1565 = vadd.f32 %v1563, %v1564
        %v1566 = vrot.slane %v1565, 1
        %v1567 = vadd.f32 %v1565, %v1566
        %v1568 = vrot.slane %v1530, 4
        %v1569 = vadd.f32 %v1530, %v1568
        %v1570 = vrot.slane %v1569, 2
        %v1571 = vadd.f32 %v1569, %v1570
        %v1572 = vrot.slane %v1571, 1
        %v1573 = vadd.f32 %v1571, %v1572
        %v1574 = vrot.slane %v1531, 4
        %v1575 = vadd.f32 %v1531, %v1574
        %v1576 = vrot.slane %v1575, 2
        %v1577 = vadd.f32 %v1575, %v1576
        %v1578 = vrot.slane %v1577, 1
        %v1579 = vadd.f32 %v1577, %v1578
        %v1580 = vrot.slane %v1532, 4
        %v1581 = vadd.f32 %v1532, %v1580
        %v1582 = vrot.slane %v1581, 2
        %v1583 = vadd.f32 %v1581, %v1582
        %v1584 = vrot.slane %v1583, 1
        %v1585 = vadd.f32 %v1583, %v1584
        %v1586 = vrot.slane %v1533, 4
        %v1587 = vadd.f32 %v1533, %v1586
        %v1588 = vrot.slane %v1587, 2
        %v1589 = vadd.f32 %v1587, %v1588
        %v1590 = vrot.slane %v1589, 1
        %v1591 = vadd.f32 %v1589, %v1590
        %v1592 = vrot.slane %v1534, 4
        %v1593 = vadd.f32 %v1534, %v1592
        %v1594 = vrot.slane %v1593, 2
        %v1595 = vadd.f32 %v1593, %v1594
        %v1596 = vrot.slane %v1595, 1
        %v1597 = vadd.f32 %v1595, %v1596
        %v1598 = vrot.slane %v1535, 4
        %v1599 = vadd.f32 %v1535, %v1598
        %v1600 = vrot.slane %v1599, 2
        %v1601 = vadd.f32 %v1599, %v1600
        %v1602 = vrot.slane %v1601, 1
        %v1603 = vadd.f32 %v1601, %v1602
        %v1604 = vrot.slane %v1536, 4
        %v1605 = vadd.f32 %v1536, %v1604
        %v1606 = vrot.slane %v1605, 2
        %v1607 = vadd.f32 %v1605, %v1606
        %v1608 = vrot.slane %v1607, 1
        %v1609 = vadd.f32 %v1607, %v1608
        %v1610 = vrot.slane %v1537, 4
        %v1611 = vadd.f32 %v1537, %v1610
        %v1612 = vrot.slane %v1611, 2
        %v1613 = vadd.f32 %v1611, %v1612
        %v1614 = vrot.slane %v1613, 1
        %v1615 = vadd.f32 %v1613, %v1614
        %v1616 = vrot.slane %v1538, 4
        %v1617 = vadd.f32 %v1538, %v1616
        %v1618 = vrot.slane %v1617, 2
        %v1619 = vadd.f32 %v1617, %v1618
        %v1620 = vrot.slane %v1619, 1
        %v1621 = vadd.f32 %v1619, %v1620
        %v1622 = vrot.slane %v1539, 4
        %v1623 = vadd.f32 %v1539, %v1622
        %v1624 = vrot.slane %v1623, 2
        %v1625 = vadd.f32 %v1623, %v1624
        %v1626 = vrot.slane %v1625, 1
        %v1627 = vadd.f32 %v1625, %v1626
        %v1628 = vrot.slane %v1540, 4
        %v1629 = vadd.f32 %v1540, %v1628
        %v1630 = vrot.slane %v1629, 2
        %v1631 = vadd.f32 %v1629, %v1630
        %v1632 = vrot.slane %v1631, 1
        %v1633 = vadd.f32 %v1631, %v1632
        %v1634 = vrot.slane %v1541, 4
        %v1635 = vadd.f32 %v1541, %v1634
        %v1636 = vrot.slane %v1635, 2
        %v1637 = vadd.f32 %v1635, %v1636
        %v1638 = vrot.slane %v1637, 1
        %v1639 = vadd.f32 %v1637, %v1638
        %v1640 = vrot.slane %v1542, 4
        %v1641 = vadd.f32 %v1542, %v1640
        %v1642 = vrot.slane %v1641, 2
        %v1643 = vadd.f32 %v1641, %v1642
        %v1644 = vrot.slane %v1643, 1
        %v1645 = vadd.f32 %v1643, %v1644
        %v1646 = vrot.slane %v1543, 4
        %v1647 = vadd.f32 %v1543, %v1646
        %v1648 = vrot.slane %v1647, 2
        %v1649 = vadd.f32 %v1647, %v1648
        %v1650 = vrot.slane %v1649, 1
        %v1651 = vadd.f32 %v1649, %v1650
        %v1652 = vmul.f32 %v899, %v899
        %v1653 = vmul.f32 %v901, %v901
        %v1654 = vmul.f32 %v942, %v942
        %v1655 = vmul.f32 %v944, %v944
        %v1656 = vmul.f32 %v985, %v985
        %v1657 = vmul.f32 %v987, %v987
        %v1658 = vmul.f32 %v1028, %v1028
        %v1659 = vmul.f32 %v1030, %v1030
        %v1660 = vmul.f32 %v1071, %v1071
        %v1661 = vmul.f32 %v903, %v903
        %v1662 = vmul.f32 %v905, %v905
        %v1663 = vmul.f32 %v946, %v946
        %v1664 = vmul.f32 %v948, %v948
        %v1665 = vmul.f32 %v989, %v989
        %v1666 = vmul.f32 %v991, %v991
        %v1667 = vmul.f32 %v1032, %v1032
        %v1668 = vmul.f32 %v1034, %v1034
        %v1669 = vmul.f32 %v1074, %v1074
        %v1670 = vrot.slane %v1652, 4
        %v1671 = vadd.f32 %v1652, %v1670
        %v1672 = vrot.slane %v1671, 2
        %v1673 = vadd.f32 %v1671, %v1672
        %v1674 = vrot.slane %v1673, 1
        %v1675 = vadd.f32 %v1673, %v1674
        %v1676 = vrot.slane %v1653, 4
        %v1677 = vadd.f32 %v1653, %v1676
        %v1678 = vrot.slane %v1677, 2
        %v1679 = vadd.f32 %v1677, %v1678
        %v1680 = vrot.slane %v1679, 1
        %v1681 = vadd.f32 %v1679, %v1680
        %v1682 = vrot.slane %v1654, 4
        %v1683 = vadd.f32 %v1654, %v1682
        %v1684 = vrot.slane %v1683, 2
        %v1685 = vadd.f32 %v1683, %v1684
        %v1686 = vrot.slane %v1685, 1
        %v1687 = vadd.f32 %v1685, %v1686
        %v1688 = vrot.slane %v1655, 4
        %v1689 = vadd.f32 %v1655, %v1688
        %v1690 = vrot.slane %v1689, 2
        %v1691 = vadd.f32 %v1689, %v1690
        %v1692 = vrot.slane %v1691, 1
        %v1693 = vadd.f32 %v1691, %v1692
        %v1694 = vrot.slane %v1656, 4
        %v1695 = vadd.f32 %v1656, %v1694
        %v1696 = vrot.slane %v1695, 2
        %v1697 = vadd.f32 %v1695, %v1696
        %v1698 = vrot.slane %v1697, 1
        %v1699 = vadd.f32 %v1697, %v1698
        %v1700 = vrot.slane %v1657, 4
        %v1701 = vadd.f32 %v1657, %v1700
        %v1702 = vrot.slane %v1701, 2
        %v1703 = vadd.f32 %v1701, %v1702
        %v1704 = vrot.slane %v1703, 1
        %v1705 = vadd.f32 %v1703, %v1704
        %v1706 = vrot.slane %v1658, 4
        %v1707 = vadd.f32 %v1658, %v1706
        %v1708 = vrot.slane %v1707, 2
        %v1709 = vadd.f32 %v1707, %v1708
        %v1710 = vrot.slane %v1709, 1
        %v1711 = vadd.f32 %v1709, %v1710
        %v1712 = vrot.slane %v1659, 4
        %v1713 = vadd.f32 %v1659, %v1712
        %v1714 = vrot.slane %v1713, 2
        %v1715 = vadd.f32 %v1713, %v1714
        %v1716 = vrot.slane %v1715, 1
        %v1717 = vadd.f32 %v1715, %v1716
        %v1718 = vrot.slane %v1660, 4
        %v1719 = vadd.f32 %v1660, %v1718
        %v1720 = vrot.slane %v1719, 2
        %v1721 = vadd.f32 %v1719, %v1720
        %v1722 = vrot.slane %v1721, 1
        %v1723 = vadd.f32 %v1721, %v1722
        %v1724 = vrot.slane %v1661, 4
        %v1725 = vadd.f32 %v1661, %v1724
        %v1726 = vrot.slane %v1725, 2
        %v1727 = vadd.f32 %v1725, %v1726
        %v1728 = vrot.slane %v1727, 1
        %v1729 = vadd.f32 %v1727, %v1728
        %v1730 = vrot.slane %v1662, 4
        %v1731 = vadd.f32 %v1662, %v1730
        %v1732 = vrot.slane %v1731, 2
        %v1733 = vadd.f32 %v1731, %v1732
        %v1734 = vrot.slane %v1733, 1
        %v1735 = vadd.f32 %v1733, %v1734
        %v1736 = vrot.slane %v1663, 4
        %v1737 = vadd.f32 %v1663, %v1736
        %v1738 = vrot.slane %v1737, 2
        %v1739 = vadd.f32 %v1737, %v1738
        %v1740 = vrot.slane %v1739, 1
        %v1741 = vadd.f32 %v1739, %v1740
        %v1742 = vrot.slane %v1664, 4
        %v1743 = vadd.f32 %v1664, %v1742
        %v1744 = vrot.slane %v1743, 2
        %v1745 = vadd.f32 %v1743, %v1744
        %v1746 = vrot.slane %v1745, 1
        %v1747 = vadd.f32 %v1745, %v1746
        %v1748 = vrot.slane %v1665, 4
        %v1749 = vadd.f32 %v1665, %v1748
        %v1750 = vrot.slane %v1749, 2
        %v1751 = vadd.f32 %v1749, %v1750
        %v1752 = vrot.slane %v1751, 1
        %v1753 = vadd.f32 %v1751, %v1752
        %v1754 = vrot.slane %v1666, 4
        %v1755 = vadd.f32 %v1666, %v1754
        %v1756 = vrot.slane %v1755, 2
        %v1757 = vadd.f32 %v1755, %v1756
        %v1758 = vrot.slane %v1757, 1
        %v1759 = vadd.f32 %v1757, %v1758
        %v1760 = vrot.slane %v1667, 4
        %v1761 = vadd.f32 %v1667, %v1760
        %v1762 = vrot.slane %v1761, 2
        %v1763 = vadd.f32 %v1761, %v1762
        %v1764 = vrot.slane %v1763, 1
        %v1765 = vadd.f32 %v1763, %v1764
        %v1766 = vrot.slane %v1668, 4
        %v1767 = vadd.f32 %v1668, %v1766
        %v1768 = vrot.slane %v1767, 2
        %v1769 = vadd.f32 %v1767, %v1768
        %v1770 = vrot.slane %v1769, 1
        %v1771 = vadd.f32 %v1769, %v1770
        %v1772 = vrot.slane %v1669, 4
        %v1773 = vadd.f32 %v1669, %v1772
        %v1774 = vrot.slane %v1773, 2
        %v1775 = vadd.f32 %v1773, %v1774
        %v1776 = vrot.slane %v1775, 1
        %v1777 = vadd.f32 %v1775, %v1776
        %v1778 = vmul.f32 %v899, %v1348
        %v1779 = vmul.f32 %v901, %v1350
        %v1780 = vmul.f32 %v942, %v1391
        %v1781 = vmul.f32 %v944, %v1393
        %v1782 = vmul.f32 %v985, %v1434
        %v1783 = vmul.f32 %v987, %v1436
        %v1784 = vmul.f32 %v1028, %v1477
        %v1785 = vmul.f32 %v1030, %v1479
        %v1786 = vmul.f32 %v1071, %v1520
        %v1787 = vmul.f32 %v903, %v1352
        %v1788 = vmul.f32 %v905, %v1354
        %v1789 = vmul.f32 %v946, %v1395
        %v1790 = vmul.f32 %v948, %v1397
        %v1791 = vmul.f32 %v989, %v1438
        %v1792 = vmul.f32 %v991, %v1440
        %v1793 = vmul.f32 %v1032, %v1481
        %v1794 = vmul.f32 %v1034, %v1483
        %v1795 = vmul.f32 %v1074, %v1523
        %v1796 = vrot.slane %v1778, 4
        %v1797 = vadd.f32 %v1778, %v1796
        %v1798 = vrot.slane %v1797, 2
        %v1799 = vadd.f32 %v1797, %v1798
        %v1800 = vrot.slane %v1799, 1
        %v1801 = vadd.f32 %v1799, %v1800
        %v1802 = vrot.slane %v1779, 4
        %v1803 = vadd.f32 %v1779, %v1802
        %v1804 = vrot.slane %v1803, 2
        %v1805 = vadd.f32 %v1803, %v1804
        %v1806 = vrot.slane %v1805, 1
        %v1807 = vadd.f32 %v1805, %v1806
        %v1808 = vrot.slane %v1780, 4
        %v1809 = vadd.f32 %v1780, %v1808
        %v1810 = vrot.slane %v1809, 2
        %v1811 = vadd.f32 %v1809, %v1810
        %v1812 = vrot.slane %v1811, 1
        %v1813 = vadd.f32 %v1811, %v1812
        %v1814 = vrot.slane %v1781, 4
        %v1815 = vadd.f32 %v1781, %v1814
        %v1816 = vrot.slane %v1815, 2
        %v1817 = vadd.f32 %v1815, %v1816
        %v1818 = vrot.slane %v1817, 1
        %v1819 = vadd.f32 %v1817, %v1818
        %v1820 = vrot.slane %v1782, 4
        %v1821 = vadd.f32 %v1782, %v1820
        %v1822 = vrot.slane %v1821, 2
        %v1823 = vadd.f32 %v1821, %v1822
        %v1824 = vrot.slane %v1823, 1
        %v1825 = vadd.f32 %v1823, %v1824
        %v1826 = vrot.slane %v1783, 4
        %v1827 = vadd.f32 %v1783, %v1826
        %v1828 = vrot.slane %v1827, 2
        %v1829 = vadd.f32 %v1827, %v1828
        %v1830 = vrot.slane %v1829, 1
        %v1831 = vadd.f32 %v1829, %v1830
        %v1832 = vrot.slane %v1784, 4
        %v1833 = vadd.f32 %v1784, %v1832
        %v1834 = vrot.slane %v1833, 2
        %v1835 = vadd.f32 %v1833, %v1834
        %v1836 = vrot.slane %v1835, 1
        %v1837 = vadd.f32 %v1835, %v1836
        %v1838 = vrot.slane %v1785, 4
        %v1839 = vadd.f32 %v1785, %v1838
        %v1840 = vrot.slane %v1839, 2
        %v1841 = vadd.f32 %v1839, %v1840
        %v1842 = vrot.slane %v1841, 1
        %v1843 = vadd.f32 %v1841, %v1842
        %v1844 = vrot.slane %v1786, 4
        %v1845 = vadd.f32 %v1786, %v1844
        %v1846 = vrot.slane %v1845, 2
        %v1847 = vadd.f32 %v1845, %v1846
        %v1848 = vrot.slane %v1847, 1
        %v1849 = vadd.f32 %v1847, %v1848
        %v1850 = vrot.slane %v1787, 4
        %v1851 = vadd.f32 %v1787, %v1850
        %v1852 = vrot.slane %v1851, 2
        %v1853 = vadd.f32 %v1851, %v1852
        %v1854 = vrot.slane %v1853, 1
        %v1855 = vadd.f32 %v1853, %v1854
        %v1856 = vrot.slane %v1788, 4
        %v1857 = vadd.f32 %v1788, %v1856
        %v1858 = vrot.slane %v1857, 2
        %v1859 = vadd.f32 %v1857, %v1858
        %v1860 = vrot.slane %v1859, 1
        %v1861 = vadd.f32 %v1859, %v1860
        %v1862 = vrot.slane %v1789, 4
        %v1863 = vadd.f32 %v1789, %v1862
        %v1864 = vrot.slane %v1863, 2
        %v1865 = vadd.f32 %v1863, %v1864
        %v1866 = vrot.slane %v1865, 1
        %v1867 = vadd.f32 %v1865, %v1866
        %v1868 = vrot.slane %v1790, 4
        %v1869 = vadd.f32 %v1790, %v1868
        %v1870 = vrot.slane %v1869, 2
        %v1871 = vadd.f32 %v1869, %v1870
        %v1872 = vrot.slane %v1871, 1
        %v1873 = vadd.f32 %v1871, %v1872
        %v1874 = vrot.slane %v1791, 4
        %v1875 = vadd.f32 %v1791, %v1874
        %v1876 = vrot.slane %v1875, 2
        %v1877 = vadd.f32 %v1875, %v1876
        %v1878 = vrot.slane %v1877, 1
        %v1879 = vadd.f32 %v1877, %v1878
        %v1880 = vrot.slane %v1792, 4
        %v1881 = vadd.f32 %v1792, %v1880
        %v1882 = vrot.slane %v1881, 2
        %v1883 = vadd.f32 %v1881, %v1882
        %v1884 = vrot.slane %v1883, 1
        %v1885 = vadd.f32 %v1883, %v1884
        %v1886 = vrot.slane %v1793, 4
        %v1887 = vadd.f32 %v1793, %v1886
        %v1888 = vrot.slane %v1887, 2
        %v1889 = vadd.f32 %v1887, %v1888
        %v1890 = vrot.slane %v1889, 1
        %v1891 = vadd.f32 %v1889, %v1890
        %v1892 = vrot.slane %v1794, 4
        %v1893 = vadd.f32 %v1794, %v1892
        %v1894 = vrot.slane %v1893, 2
        %v1895 = vadd.f32 %v1893, %v1894
        %v1896 = vrot.slane %v1895, 1
        %v1897 = vadd.f32 %v1895, %v1896
        %v1898 = vrot.slane %v1795, 4
        %v1899 = vadd.f32 %v1795, %v1898
        %v1900 = vrot.slane %v1899, 2
        %v1901 = vadd.f32 %v1899, %v1900
        %v1902 = vrot.slane %v1901, 1
        %v1903 = vadd.f32 %v1901, %v1902
        %v1904 = vmul.f32 %v1549, %v1675
        %v1905 = vmul.f32 %v1555, %v1681
        %v1906 = vmul.f32 %v1561, %v1687
        %v1907 = vmul.f32 %v1567, %v1693
        %v1908 = vmul.f32 %v1573, %v1699
        %v1909 = vmul.f32 %v1579, %v1705
        %v1910 = vmul.f32 %v1585, %v1711
        %v1911 = vmul.f32 %v1591, %v1717
        %v1912 = vmul.f32 %v1597, %v1723
        %v1913 = vmul.f32 %v1603, %v1729
        %v1914 = vmul.f32 %v1609, %v1735
        %v1915 = vmul.f32 %v1615, %v1741
        %v1916 = vmul.f32 %v1621, %v1747
        %v1917 = vmul.f32 %v1627, %v1753
        %v1918 = vmul.f32 %v1633, %v1759
        %v1919 = vmul.f32 %v1639, %v1765
        %v1920 = vmul.f32 %v1645, %v1771
        %v1921 = vmul.f32 %v1651, %v1777
        %v1922 = vmax.f32 %v1904, 1e-30
        %v1923 = vmax.f32 %v1905, 1e-30
        %v1924 = vmax.f32 %v1906, 1e-30
        %v1925 = vmax.f32 %v1907, 1e-30
        %v1926 = vmax.f32 %v1908, 1e-30
        %v1927 = vmax.f32 %v1909, 1e-30
        %v1928 = vmax.f32 %v1910, 1e-30
        %v1929 = vmax.f32 %v1911, 1e-30
        %v1930 = vmax.f32 %v1912, 1e-30
        %v1931 = vmax.f32 %v1913, 1e-30
        %v1932 = vmax.f32 %v1914, 1e-30
        %v1933 = vmax.f32 %v1915, 1e-30
        %v1934 = vmax.f32 %v1916, 1e-30
        %v1935 = vmax.f32 %v1917, 1e-30
        %v1936 = vmax.f32 %v1918, 1e-30
        %v1937 = vmax.f32 %v1919, 1e-30
        %v1938 = vmax.f32 %v1920, 1e-30
        %v1939 = vmax.f32 %v1921, 1e-30
        %v1940 = vrsqrt.pop %v1922
        %v1941 = vrsqrt.pop %v1923
        %v1942 = vrsqrt.pop %v1924
        %v1943 = vrsqrt.pop %v1925
        %v1944 = vrsqrt.pop %v1926
        %v1945 = vrsqrt.pop %v1927
        %v1946 = vrsqrt.pop %v1928
        %v1947 = vrsqrt.pop %v1929
        %v1948 = vrsqrt.pop %v1930
        %v1949 = vrsqrt.pop %v1931
        %v1950 = vrsqrt.pop %v1932
        %v1951 = vrsqrt.pop %v1933
        %v1952 = vrsqrt.pop %v1934
        %v1953 = vrsqrt.pop %v1935
        %v1954 = vrsqrt.pop %v1936
        %v1955 = vrsqrt.pop %v1937
        %v1956 = vrsqrt.pop %v1938
        %v1957 = vrsqrt.pop %v1939
        %v1958 = vmul.f32 %v1801, %v1940
        %v1959 = vmul.f32 %v1807, %v1941
        %v1960 = vmul.f32 %v1813, %v1942
        %v1961 = vmul.f32 %v1819, %v1943
        %v1962 = vmul.f32 %v1825, %v1944
        %v1963 = vmul.f32 %v1831, %v1945
        %v1964 = vmul.f32 %v1837, %v1946
        %v1965 = vmul.f32 %v1843, %v1947
        %v1966 = vmul.f32 %v1849, %v1948
        %v1967 = vmul.f32 %v1855, %v1949
        %v1968 = vmul.f32 %v1861, %v1950
        %v1969 = vmul.f32 %v1867, %v1951
        %v1970 = vmul.f32 %v1873, %v1952
        %v1971 = vmul.f32 %v1879, %v1953
        %v1972 = vmul.f32 %v1885, %v1954
        %v1973 = vmul.f32 %v1891, %v1955
        %v1974 = vmul.f32 %v1897, %v1956
        %v1975 = vmul.f32 %v1903, %v1957
        %v1976 = vmul.f32 %v450, %v1958
        %v1977 = vmul.f32 %v452, %v1959
        %v1978 = vmul.f32 %v493, %v1960
        %v1979 = vmul.f32 %v495, %v1961
        %v1980 = vmul.f32 %v536, %v1962
        %v1981 = vmul.f32 %v538, %v1963
        %v1982 = vmul.f32 %v579, %v1964
        %v1983 = vmul.f32 %v581, %v1965
        %v1984 = vmul.f32 %v622, %v1966
        %v1985 = vmul.f32 %v454, %v1967
        %v1986 = vmul.f32 %v456, %v1968
        %v1987 = vmul.f32 %v497, %v1969
        %v1988 = vmul.f32 %v499, %v1970
        %v1989 = vmul.f32 %v540, %v1971
        %v1990 = vmul.f32 %v542, %v1972
        %v1991 = vmul.f32 %v583, %v1973
        %v1992 = vmul.f32 %v585, %v1974
        %v1993 = vmul.f32 %v625, %v1975
        %v1994 = vpack.c.bf16 %v1976, %v1976
        %v1995 = vpack.c.bf16 %v1977, %v1977
        %v1996 = vpack.c.bf16 %v1978, %v1978
        %v1997 = vpack.c.bf16 %v1979, %v1979
        %v1998 = vpack.c.bf16 %v1980, %v1980
        %v1999 = vpack.c.bf16 %v1981, %v1981
        %v2000 = vpack.c.bf16 %v1982, %v1982
        %v2001 = vpack.c.bf16 %v1983, %v1983
        %v2002 = vpack.c.bf16 %v1984, %v1984
        %v2003 = vpack.c.bf16 %v1985, %v1985
        %v2004 = vpack.c.bf16 %v1986, %v1986
        %v2005 = vpack.c.bf16 %v1987, %v1987
        %v2006 = vpack.c.bf16 %v1988, %v1988
        %v2007 = vpack.c.bf16 %v1989, %v1989
        %v2008 = vpack.c.bf16 %v1990, %v1990
        %v2009 = vpack.c.bf16 %v1991, %v1991
        %v2010 = vpack.c.bf16 %v1992, %v1992
        %v2011 = vpack.c.bf16 %v1993, %v1993
        %v2030 = vunpack.c.l.b16 %v1994
        %v2031 = vunpack.c.l.b16 %v1995
        %v2032 = vunpack.c.l.b16 %v1996
        %v2033 = vunpack.c.l.b16 %v1997
        %v2034 = vunpack.c.l.b16 %v1998
        %v2035 = vunpack.c.l.b16 %v1999
        %v2036 = vunpack.c.l.b16 %v2000
        %v2037 = vunpack.c.l.b16 %v2001
        %v2038 = vunpack.c.l.b16 %v2002
        %v2039 = vunpack.c.l.b16 %v2003
        %v2040 = vunpack.c.l.b16 %v2004
        %v2041 = vunpack.c.l.b16 %v2005
        %v2042 = vunpack.c.l.b16 %v2006
        %v2043 = vunpack.c.l.b16 %v2007
        %v2044 = vunpack.c.l.b16 %v2008
        %v2045 = vunpack.c.l.b16 %v2009
        %v2046 = vunpack.c.l.b16 %v2010
        %v2047 = vunpack.c.l.b16 %v2011
        %v2048 = vpack.c.b16 %v2031, %v2030
        %v2049 = vpack.c.b16 %v2033, %v2032
        %v2050 = vpack.c.b16 %v2035, %v2034
        %v2051 = vpack.c.b16 %v2037, %v2036
        %v2052 = vpack.c.b16 %v2038, %v2038
        %v2053 = vpack.c.b16 %v2040, %v2039
        %v2054 = vpack.c.b16 %v2042, %v2041
        %v2055 = vpack.c.b16 %v2044, %v2043
        %v2056 = vpack.c.b16 %v2046, %v2045
        %v2057 = vpack.c.b16 %v2047, %v2047
        %2068 = vst [vmem:[%s176] sm:$0xff] %v2048
        %2069 = vst [vmem:[%s176 + $0x8] sm:$0xff] %v2049
        %2070 = vst [vmem:[%s176 + $0x10] sm:$0xff] %v2050
        %2071 = vst [vmem:[%s176 + $0x18] sm:$0xff] %v2051
        %2072 = vst [vmem:[%s176 + $0x20] sm:$0xf] %v2052
        %2073 = vst [vmem:[%s176 + $0x24] sm:$0xff] %v2053
        %2074 = vst [vmem:[%s176 + $0x2c] sm:$0xff] %v2054
        %2075 = vst [vmem:[%s176 + $0x34] sm:$0xff] %v2055
        %2076 = vst [vmem:[%s176 + $0x3c] sm:$0xff] %v2056
        %2077 = vst [vmem:[%s176 + $0x44] sm:$0xf] %v2057
        %s2078 = sand.u32 %s75, 1
        %s2079 = scalar_lea.sflag [#allocation4], %s2078
        %s2080 = sand.u32 %s75, 1
        %s2081 = smul.addr %s2080, 72
        %s2082 = scalar_lea.vmem [#allocation7], %s2081
        // Predicated region
        $region37: #{tpu_custom_call.1} parent=27 // pred_check
          %p2083 = pneg %p85
        $region38: #{tpu_custom_call.1} parent=27 // pred_check_branch
          %2085 = sbr.rel (%p2083) target = $region40
        $region39: #{tpu_custom_call.1} parent=27 // pred_region
          %s2086 = smul.u32 9, %s20
          %s2088 = ssub.s32 1152, 1152
          %2089 = vsyncadd %s2079, %s2088
          %s2090 = smul.addr %s2086, 64
          %s2091 = scalar_lea.hbm %s2, %s2090
          %s2092 = sshll.u32 %s2082, 4
          %s2093 = int_to_ptr.vmem [resolvable:$true] %s2092
          %2098 = dma.vmem_to_hbm [thread:$0]  %s2093, 1152, %s2091, %s2079, 576, 1152, 36
        $region40: #{tpu_custom_call.1} parent=27 // pred_fallthru
          _
      $region28: #{tpu_custom_call.1} parent=5 // pred_fallthru
        _
      %p2099 = scmp.le.s32.totalorder 2, %s15
      // Predicated region
      $region41: #{tpu_custom_call.1} parent=5 // pred_check
        %p2100 = pneg %p2099
      $region42: #{tpu_custom_call.1} parent=5 // pred_check_branch
        %2102 = sbr.rel (%p2100) target = $region44
      $region43: #{tpu_custom_call.1} parent=5 // pred_region
        %s2103 = ssub.s32 %s15, 2
        // Predicated region
        $region45: #{tpu_custom_call.1} parent=43 // pred_check
          %p2104 = pneg %p91
        $region46: #{tpu_custom_call.1} parent=43 // pred_check_branch
          %2106 = sbr.rel (%p2104) target = $region48
        $region47: #{tpu_custom_call.1} parent=43 // pred_region
          %s2107 = sand.u32 %s76, 1
          %s2108 = scalar_lea.sflag [#allocation4], %s2107
          %s2109 = sand.u32 %s76, 1
          %s2110 = smul.addr %s2109, 72
          %s2111 = scalar_lea.vmem [#allocation7], %s2110
          %2112 = dma.done %s2108, 1152
        $region48: #{tpu_custom_call.1} parent=43 // pred_fallthru
          _
      $region44: #{tpu_custom_call.1} parent=5 // pred_fallthru
        _
    $region6: #{tpu_custom_call.1} parent=1 // loop_footer
      %s19 = sadd.s32 1, %s15
    $region7: #{tpu_custom_call.1} parent=1 // loop_footer_branch
      %14 = sbr.rel target = $region3
    $region8: #{tpu_custom_call.1} parent=1 // loop_exit
      _
    %2113 = vsyncpa [#allocation3], 1
    %s2114 = scalar_lea.sflag [#allocation3], 1
    %2115 = vsyncpa %s2114, 1
    %2116 = vsyncpa [#allocation6], 1
    %s2117 = scalar_lea.sflag [#allocation6], 1
    %2118 = vsyncpa %s2117, 1
    %2119 = vsyncpa [#allocation4], 1
    %s2120 = scalar_lea.sflag [#allocation4], 1
    %2121 = vsyncpa %s2120, 1

</llo_original>
